<compile_context>
chip_gen: v5e
topology: v5e:2x2
jax: 0.10.0
libtpu: 0.0.40
codegen_flags: <defaults>
</compile_context>

<pallas_src>
import functools
import types

import jax
import jax.numpy as jnp
from jax import lax
from jax.experimental import pallas as pl
from jax.experimental.pallas import tpu as pltpu


# ----------------------------------------------------------------------------
# Fused kernel.  Grid = (B, n_point_tiles); per step one (N_tile, H) slab of
# pre-activated point features is turned into per-point scene features, K/V,
# and folded into an online-softmax cross-attention accumulator.  The last
# point tile runs the decoder epilogue (attention output projection, LN, FFN,
# LN, mask head) and writes emb[NQ,C] + masks[NQ,N].
# ----------------------------------------------------------------------------
def m2t2_fused_kernel(
    h_ref, w2_ref, q_ref, qproj_ref, wkv_ref, wo_ref,
    ffw1_ref, ffw2_ref, maskw_ref, sp_ref,
    emb_out_ref, mask_out_ref,
    feat_scr, m_scr, l_scr, acc_scr,
):
    c = w2_ref.shape[1]
    f = ffw1_ref.shape[1]
    n_tile = h_ref.shape[1]

    n_idx = pl.program_id(1)
    n_tiles = pl.num_programs(1)

    # packed small params: rows = [b2, ffb1, ffb2, ln1g, ln1b, ln2g, ln2b, pad]
    sp = sp_ref[...]
    b2 = sp[0:1, :c]
    ffb1, ffb2 = sp[1:2, :f], sp[2:3, :c]
    ln1g, ln1b = sp[3:4, :c], sp[4:5, :c]
    ln2g, ln2b = sp[5:6, :c], sp[6:7, :c]

    @pl.when(n_idx == 0)
    def _():
        m_scr[...] = jnp.full_like(m_scr, -jnp.inf)
        l_scr[...] = jnp.zeros_like(l_scr)
        acc_scr[...] = jnp.zeros_like(acc_scr)

    # ---- scene encoder (second shared-MLP layer) on this point tile ---------
    h = h_ref[0]                                       # (n_tile, H) bf16
    feat = jnp.dot(h, w2_ref[...], preferred_element_type=jnp.float32) + b2
    feat = jnp.maximum(feat, 0.0)                      # (n_tile, C) f32
    feat_bf = feat.astype(jnp.bfloat16)

    # Persist per-point features (bf16) — the mask head needs them again after
    # the softmax over ALL points is finished (epilogue).  Never leaves VMEM.
    start = pl.multiple_of(n_idx * n_tile, n_tile)
    feat_scr[pl.ds(start, n_tile), :] = feat_bf

    # ---- fused K / V projection for this tile (maskw is NOT folded here) ----
    kv = jnp.dot(feat_bf, wkv_ref[...], preferred_element_type=jnp.float32)
    kv_bf = kv.astype(jnp.bfloat16)                    # cast once, static slices
    k = kv_bf[:, :c]
    v = kv_bf[:, c:]

    # ---- online-softmax cross attention (queries attend to scene points) ----
    # qproj = (queries @ wq) * 1/sqrt(C), precomputed in the wrapper (bf16).
    s = lax.dot_general(qproj_ref[...], k, (((1,), (1,)), ((), ())),
                        preferred_element_type=jnp.float32)      # (NQ, n_tile)
    m_prev = m_scr[...]
    m_new = jnp.maximum(m_prev, jnp.max(s, axis=-1, keepdims=True))
    alpha = jnp.exp(m_prev - m_new)
    p = jnp.exp(s - m_new)
    l_scr[...] = alpha * l_scr[...] + jnp.sum(p, axis=-1, keepdims=True)
    acc_scr[...] = alpha * acc_scr[...] + jnp.dot(
        p.astype(jnp.bfloat16), v, preferred_element_type=jnp.float32)
    m_scr[...] = m_new

    # ---- epilogue: output projection, LN, FFN, LN, mask head ----------------
    @pl.when(n_idx == n_tiles - 1)
    def _():
        ctx = acc_scr[...] * pl.reciprocal(l_scr[...], approx=True)
        xq = q_ref[...] + jnp.dot(ctx.astype(jnp.bfloat16), wo_ref[...],
                                  preferred_element_type=jnp.float32)

        mu = jnp.mean(xq, axis=-1, keepdims=True)
        var = jnp.mean((xq - mu) ** 2, axis=-1, keepdims=True)
        xq = (xq - mu) * lax.rsqrt(var + 1e-5) * ln1g + ln1b

        hf = jnp.dot(xq.astype(jnp.bfloat16), ffw1_ref[...],
                     preferred_element_type=jnp.float32) + ffb1
        hf = jnp.maximum(hf, 0.0)
        y = xq + jnp.dot(hf.astype(jnp.bfloat16), ffw2_ref[...],
                         preferred_element_type=jnp.float32) + ffb2
        mu2 = jnp.mean(y, axis=-1, keepdims=True)
        var2 = jnp.mean((y - mu2) ** 2, axis=-1, keepdims=True)
        emb = (y - mu2) * lax.rsqrt(var2 + 1e-5) * ln2g + ln2b    # (NQ, C) f32
        emb_out_ref[0] = emb

        # mask head on the QUERY side: (NQ,C)x(C,C) tiny matmul, then contract
        # against the stored per-point features: masks = (emb @ maskw) @ feat^T
        emb_m = jnp.dot(emb.astype(jnp.bfloat16), maskw_ref[...],
                        preferred_element_type=jnp.float32)
        mask_out_ref[0] = lax.dot_general(
            emb_m.astype(jnp.bfloat16), feat_scr[...],
            (((1,), (1,)), ((), ())),
            preferred_element_type=jnp.float32).astype(mask_out_ref.dtype)


def _pick_point_tile(n, target):
    """Largest 128-multiple divisor of n that is <= target, else untiled."""
    if n <= target:
        return n
    t = (target // 128) * 128
    while t >= 128:
        if n % t == 0:
            return t
        t -= 128
    return n  # TODO(synk): pad ragged point counts instead of falling back.


def m2t2_fused_call(h, kp, n_tile=1024):
    B, N, H = h.shape
    C = kp["w2"].shape[1]
    F = kp["ffw1"].shape[1]
    NQ = kp["queries"].shape[0]
    P = kp["smallp"].shape[1]

    # N-tile: ~1024 is the v7x-safe default (64 MiB VMEM); v5e/v6e can use
    # 2048-4096.  Demo shapes pass a smaller tile to exercise >1 tile.
    n_tile = _pick_point_tile(N, n_tile)
    n_steps = N // n_tile

    def shared(shape):
        # TODO(synk): these weight blocks never change across the grid; consider
        # pipeline_mode=pl.Buffered(1) to reclaim double-buffer VMEM on v7x.
        return pl.BlockSpec(shape, lambda b, n: tuple(0 for _ in shape))

    emb, masks = pl.pallas_call(
        m2t2_fused_kernel,
        out_shape=(
            jax.ShapeDtypeStruct((B, NQ, C), jnp.float32),
            jax.ShapeDtypeStruct((B, NQ, N), jnp.bfloat16),   # bf16 mask writeback
        ),
        grid=(B, n_steps),
        in_specs=[
            pl.BlockSpec((1, n_tile, H), lambda b, n: (b, n, 0)),   # h (bf16)
            shared((H, C)),            # w2 (bf16)
            shared((NQ, C)),           # queries (f32, residual path)
            shared((NQ, C)),           # qproj = (queries@wq)*scale (bf16)
            shared((C, 2 * C)),        # [wk | wv] (bf16)
            shared((C, C)),            # wo (bf16)
            shared((C, F)),            # ffw1 (bf16)
            shared((F, C)),            # ffw2 (bf16)
            shared((C, C)),            # maskw (bf16, query-side)
            shared((8, P)),            # packed biases + layernorm params (f32)
        ],
        out_specs=(
            pl.BlockSpec((1, NQ, C), lambda b, n: (b, 0, 0)),
            pl.BlockSpec((1, NQ, N), lambda b, n: (b, 0, 0)),
        ),
        scratch_shapes=[
            pltpu.VMEM((N, C), jnp.bfloat16),   # persistent per-point features
            pltpu.VMEM((NQ, 1), jnp.float32),   # online-softmax running max
            pltpu.VMEM((NQ, 1), jnp.float32),   # online-softmax running sum
            pltpu.VMEM((NQ, C), jnp.float32),   # attention accumulator
        ],
        compiler_params=pltpu.CompilerParams(
            dimension_semantics=("parallel", "arbitrary"),
            vmem_limit_bytes=48 * 1024 * 1024,
        ),
    )(h, kp["w2"], kp["queries"], kp["qproj"], kp["wkv"], kp["wo"],
      kp["ffw1"], kp["ffw2"], kp["maskw"], kp["smallp"])
    return emb, masks


# ----------------------------------------------------------------------------
# Jitted forward: XLA-hoisted first point-MLP layer (lane-dense kernel input),
# fused Pallas kernel, then the tiny objectness head (lane-width-1 output is
# cheaper as a plain XLA op than a masked-store Pallas output).
# ----------------------------------------------------------------------------
@functools.partial(jax.jit, static_argnames=("n_tile",))
def _m2t2_forward(x, kp, n_tile):
    h = jnp.maximum(jnp.einsum("bnc,ch->bnh", x, kp["w1"]) + kp["b1"], 0.0)
    emb, masks = m2t2_fused_call(h.astype(jnp.bfloat16), kp, n_tile=n_tile)
    obj = jnp.einsum("bqc,co->bqo", emb, kp["objw"]) + kp["objb"]
    return emb, masks, obj[..., 0]


# ----------------------------------------------------------------------------
# Parameter packing (done once at model construction)
# ----------------------------------------------------------------------------
def pack_kernel_params(scene, dec):
    C = dec["wq"].shape[0]
    F = dec["ffw1"].shape[1]
    P = max(C, F)

    def row(v):
        v = jnp.reshape(v, (-1,)).astype(jnp.float32)
        return jnp.pad(v, (0, P - v.shape[0]))

    # batch-invariant query projection with the 1/sqrt(C) scale folded in
    # (single-head attention; becomes 1/sqrt(head_dim) if multi-head returns).
    qproj = (dec["queries"] @ dec["wq"]) * (1.0 / jnp.sqrt(jnp.float32(C)))

    return {
        "w1": scene["w1"].astype(jnp.float32),
        "b1": scene["b1"].astype(jnp.float32),
        "w2": scene["w2"].astype(jnp.bfloat16),
        "queries": dec["queries"].astype(jnp.float32),
        "qproj": qproj.astype(jnp.bfloat16),
        "wkv": jnp.concatenate([dec["wk"], dec["wv"]], axis=1).astype(jnp.bfloat16),
        "wo": dec["wo"].astype(jnp.bfloat16),
        "ffw1": dec["ffw1"].astype(jnp.bfloat16),
        "ffw2": dec["ffw2"].astype(jnp.bfloat16),
        "maskw": dec["maskw"].astype(jnp.bfloat16),
        "smallp": jnp.stack([
            row(scene["b2"]),
            row(dec["ffb1"]), row(dec["ffb2"]),
            row(dec["ln1g"]), row(dec["ln1b"]),
            row(dec["ln2g"]), row(dec["ln2b"]),
            row(jnp.zeros((1,), jnp.float32)),
        ]),
        "objw": dec["objw"].astype(jnp.float32),
        "objb": dec["objb"].astype(jnp.float32),
    }


# ----------------------------------------------------------------------------
# Thin module wrappers mirroring the PyTorch composition
# ----------------------------------------------------------------------------
class SceneEncoder:
    """PointNet-style shared MLP (stand-in for PointNet2MSG) — parameter holder."""

    def __init__(self, params):
        self.params = params
        self.out_channels = {"res0": params["w2"].shape[1]}


class ContactDecoder:
    """Single cross-attention decoder layer + objectness / mask heads — parameter holder."""

    def __init__(self, params):
        self.params = params
        self.mask_feature = "res0"


class M2T2:
    def __init__(self, scene_encoder, contact_decoder, object_encoder=None,
                 grasp_mlp=None, set_criterion=None, grasp_criterion=None,
                 place_criterion=None, n_tile=1024):
        self.scene_encoder = scene_encoder
        self.object_encoder = object_encoder
        self.contact_decoder = contact_decoder
        self.grasp_mlp = grasp_mlp
        self.set_criterion = set_criterion
        self.grasp_criterion = grasp_criterion
        self.place_criterion = place_criterion
        self._n_tile = n_tile
        # pack + cast once: bf16 MXU operands, fused K/V weights, maskw kept on
        # the query side, scale folded into the query projection, small params
        # packed into a single (8, P) block.
        self._kp = pack_kernel_params(scene_encoder.params, contact_decoder.params)

    def forward(self, data, cfg):
        # scene encoder + contact decoder run as ONE fused pallas_call; the
        # per-point feature map stays VMEM-resident between them.
        emb, masks, obj = _m2t2_forward(data["inputs"], self._kp, self._n_tile)

        object_feat = {"features": {}}
        if self.object_encoder is not None:
            object_feat = self.object_encoder(data["object_inputs"])
        if "task_is_place" in data:
            for key, val in object_feat["features"].items():
                object_feat["features"][key] = (
                    val * data["task_is_place"].reshape(
                        data["task_is_place"].shape[0], 1, 1))

        outputs = [{
            "objectness": obj,
            "grasping_masks": masks,
            "matched_grasping_masks": masks,
        }]
        losses = {}
        # TODO(synk): PlaceCriterion / SetCriterion (Hungarian matching) /
        # GraspCriterion / ActionDecoder(grasp_mlp) involve data-dependent
        # matching & gathers with no clean static-shape Pallas equivalent;
        # all are None in this module configuration (__init__ defaults).
        if self.set_criterion is None:
            outputs = outputs[-1]
        # NOTE: the PyTorch forward also builds obj_embedding and a sigmoid
        # confidence list here, but with grasp_mlp / grasp_criterion = None they
        # are dead; omitted to avoid an eager full-tensor sigmoid over masks.
        return outputs, losses


# ----------------------------------------------------------------------------
# Deterministic parameter init
# ----------------------------------------------------------------------------
def init_params(key, cin, hidden, c, nq, ffn):
    ks = jax.random.split(key, 16)

    def w(k, shape, scale=0.1):
        return (scale * jax.random.normal(k, shape)).astype(jnp.float32)

    scene = {
        "w1": w(ks[0], (cin, hidden)),
        "b1": jnp.zeros((1, hidden), jnp.float32),
        "w2": w(ks[1], (hidden, c)),
        "b2": jnp.zeros((1, c), jnp.float32),
    }
    decoder = {
        "queries": w(ks[2], (nq, c)),
        "wq": w(ks[3], (c, c)),
        "wk": w(ks[4], (c, c)),
        "wv": w(ks[5], (c, c)),
        "wo": w(ks[6], (c, c)),
        "ffw1": w(ks[7], (c, ffn)),
        "ffb1": jnp.zeros((1, ffn), jnp.float32),
        "ffw2": w(ks[8], (ffn, c)),
        "ffb2": jnp.zeros((1, c), jnp.float32),
        "ln1g": jnp.ones((1, c), jnp.float32),
        "ln1b": jnp.zeros((1, c), jnp.float32),
        "ln2g": jnp.ones((1, c), jnp.float32),
        "ln2b": jnp.zeros((1, c), jnp.float32),
        "maskw": w(ks[9], (c, c)),
        "objw": w(ks[10], (c, 1)),
        "objb": jnp.zeros((1, 1), jnp.float32),
    }
    return scene, decoder


if __name__ == "__main__":
    # small demo shapes; N_TILE < N so the online-softmax tiling path runs.
    B, N, CIN, HID, C, NQ, FFN = 2, 256, 6, 64, 128, 8, 256
    N_TILE = 128

    key = jax.random.PRNGKey(0)
    k_data, k_param = jax.random.split(key)
    scene_params, decoder_params = init_params(k_param, CIN, HID, C, NQ, FFN)

    # inputs: xyz + rgb per point  (PyTorch would be [B, 6, N]; here [B, N, 6])
    inputs = jax.random.normal(k_data, (B, N, CIN), dtype=jnp.float32)
    data = {"inputs": inputs, "points": inputs[..., :3]}
    cfg = types.SimpleNamespace(mask_thresh=0.5)

    model = M2T2(
        scene_encoder=SceneEncoder(scene_params),
        contact_decoder=ContactDecoder(decoder_params),
        n_tile=N_TILE,
    )
    outputs, losses = model.forward(data, cfg)
    jax.block_until_ready(outputs)

    assert outputs["grasping_masks"].shape == (B, NQ, N)
    assert outputs["objectness"].shape == (B, NQ)
    assert losses == {}
    print("KERNEL_OK")
</pallas_src>

<mosaic_0001>
module attributes {stable_mosaic.version = 11 : i64} {
  func.func @m2t2_fused_kernel(%arg0: i32, %arg1: i32, %arg2: memref<1x128x64xbf16, #tpu.memory_space<vmem>>, %arg3: memref<64x128xbf16, #tpu.memory_space<vmem>>, %arg4: memref<8x128xf32, #tpu.memory_space<vmem>>, %arg5: memref<8x128xbf16, #tpu.memory_space<vmem>>, %arg6: memref<128x256xbf16, #tpu.memory_space<vmem>>, %arg7: memref<128x128xbf16, #tpu.memory_space<vmem>>, %arg8: memref<128x256xbf16, #tpu.memory_space<vmem>>, %arg9: memref<256x128xbf16, #tpu.memory_space<vmem>>, %arg10: memref<128x128xbf16, #tpu.memory_space<vmem>>, %arg11: memref<8x256xf32, #tpu.memory_space<vmem>>, %arg12: memref<1x8x128xf32, #tpu.memory_space<vmem>>, %arg13: memref<1x8x256xbf16, #tpu.memory_space<vmem>>, %arg14: memref<256x128xbf16, #tpu.memory_space<vmem>>, %arg15: memref<8x1xf32, #tpu.memory_space<vmem>>, %arg16: memref<8x1xf32, #tpu.memory_space<vmem>>, %arg17: memref<8x128xf32, #tpu.memory_space<vmem>>) attributes {dimension_semantics = [#tpu.dimension_semantics<parallel>, #tpu.dimension_semantics<arbitrary>], iteration_bounds = array<i64: 2, 2>, scalar_prefetch = 0 : i64, scratch_operands = 4 : i64, tpu.core_type = #tpu.core_type<tc>, window_params = [{transform_indices = @transform_0, window_bounds = array<i64: 1, 128, 64>}, {pipeline_mode = #tpu.pipeline_mode<synchronous>, transform_indices = @transform_1, window_bounds = array<i64: 64, 128>}, {pipeline_mode = #tpu.pipeline_mode<synchronous>, transform_indices = @transform_2, window_bounds = array<i64: 8, 128>}, {pipeline_mode = #tpu.pipeline_mode<synchronous>, transform_indices = @transform_3, window_bounds = array<i64: 8, 128>}, {pipeline_mode = #tpu.pipeline_mode<synchronous>, transform_indices = @transform_4, window_bounds = array<i64: 128, 256>}, {pipeline_mode = #tpu.pipeline_mode<synchronous>, transform_indices = @transform_5, window_bounds = array<i64: 128, 128>}, {pipeline_mode = #tpu.pipeline_mode<synchronous>, transform_indices = @transform_6, window_bounds = array<i64: 128, 256>}, {pipeline_mode = #tpu.pipeline_mode<synchronous>, transform_indices = @transform_7, window_bounds = array<i64: 256, 128>}, {pipeline_mode = #tpu.pipeline_mode<synchronous>, transform_indices = @transform_8, window_bounds = array<i64: 128, 128>}, {pipeline_mode = #tpu.pipeline_mode<synchronous>, transform_indices = @transform_9, window_bounds = array<i64: 8, 256>}, {transform_indices = @transform_10, window_bounds = array<i64: 1, 8, 128>}, {transform_indices = @transform_11, window_bounds = array<i64: 1, 8, 256>}]} {
    %c0 = arith.constant 0 : index
    %c0_0 = arith.constant 0 : index
    %0 = vector.load %arg11[%c0, %c0_0] : memref<8x256xf32, #tpu.memory_space<vmem>>, vector<8x256xf32>
    %1 = vector.extract_strided_slice %0 {offsets = [0, 0], sizes = [1, 128], strides = [1, 1]} : vector<8x256xf32> to vector<1x128xf32>
    %2 = vector.extract_strided_slice %0 {offsets = [1, 0], sizes = [1, 256], strides = [1, 1]} : vector<8x256xf32> to vector<1x256xf32>
    %3 = vector.extract_strided_slice %0 {offsets = [2, 0], sizes = [1, 128], strides = [1, 1]} : vector<8x256xf32> to vector<1x128xf32>
    %4 = vector.extract_strided_slice %0 {offsets = [3, 0], sizes = [1, 128], strides = [1, 1]} : vector<8x256xf32> to vector<1x128xf32>
    %5 = vector.extract_strided_slice %0 {offsets = [4, 0], sizes = [1, 128], strides = [1, 1]} : vector<8x256xf32> to vector<1x128xf32>
    %6 = vector.extract_strided_slice %0 {offsets = [5, 0], sizes = [1, 128], strides = [1, 1]} : vector<8x256xf32> to vector<1x128xf32>
    %7 = vector.extract_strided_slice %0 {offsets = [6, 0], sizes = [1, 128], strides = [1, 1]} : vector<8x256xf32> to vector<1x128xf32>
    %c0_i32 = arith.constant 0 : i32
    %8 = arith.cmpi eq, %arg1, %c0_i32 : i32
    %9 = arith.extui %8 : i1 to i32
    %c0_i32_1 = arith.constant 0 : i32
    %10 = arith.cmpi ne, %9, %c0_i32_1 : i32
    scf.if %10 {
      %cst_31 = arith.constant 0xFF800000 : f32
      %57 = vector.broadcast %cst_31 : f32 to vector<8x1xf32>
      %c0_32 = arith.constant 0 : index
      %c0_33 = arith.constant 0 : index
      %58 = vector.load %arg15[%c0_32, %c0_33] : memref<8x1xf32, #tpu.memory_space<vmem>>, vector<8x1xf32>
      tpu.vector_store %arg15[%c0_32, %c0_33], %57 {strides = array<i32>} : memref<8x1xf32, #tpu.memory_space<vmem>>, vector<8x1xf32>,
      %cst_34 = arith.constant 0.000000e+00 : f32
      %59 = vector.broadcast %cst_34 : f32 to vector<8x1xf32>
      %c0_35 = arith.constant 0 : index
      %c0_36 = arith.constant 0 : index
      %60 = vector.load %arg16[%c0_35, %c0_36] : memref<8x1xf32, #tpu.memory_space<vmem>>, vector<8x1xf32>
      tpu.vector_store %arg16[%c0_35, %c0_36], %59 {strides = array<i32>} : memref<8x1xf32, #tpu.memory_space<vmem>>, vector<8x1xf32>,
      %cst_37 = arith.constant 0.000000e+00 : f32
      %61 = vector.broadcast %cst_37 : f32 to vector<8x128xf32>
      %c0_38 = arith.constant 0 : index
      %c0_39 = arith.constant 0 : index
      %62 = vector.load %arg17[%c0_38, %c0_39] : memref<8x128xf32, #tpu.memory_space<vmem>>, vector<8x128xf32>
      tpu.vector_store %arg17[%c0_38, %c0_39], %61 {strides = array<i32>} : memref<8x128xf32, #tpu.memory_space<vmem>>, vector<8x128xf32>,
    } else {
    }
    %c0_2 = arith.constant 0 : index
    %c0_3 = arith.constant 0 : index
    %c0_4 = arith.constant 0 : index
    %11 = vector.load %arg2[%c0_2, %c0_3, %c0_4] : memref<1x128x64xbf16, #tpu.memory_space<vmem>>, vector<1x128x64xbf16>
    %12 = vector.shape_cast %11 : vector<1x128x64xbf16> to vector<128x64xbf16>
    %c0_5 = arith.constant 0 : index
    %c0_6 = arith.constant 0 : index
    %13 = vector.load %arg3[%c0_5, %c0_6] : memref<64x128xbf16, #tpu.memory_space<vmem>>, vector<64x128xbf16>
    %cst = arith.constant dense<0.000000e+00> : vector<128x128xf32>
    %14 = tpu.matmul %12, %13, %cst {dimension_numbers = #tpu.dot_dimension_numbers<[1], [0], [0], [1], [0, 0, 1, 1], [], []>} : vector<128x64xbf16>, vector<64x128xbf16>, vector<128x128xf32> -> vector<128x128xf32>
    %15 = vector.broadcast %1 : vector<1x128xf32> to vector<128x128xf32>
    %16 = arith.addf %14, %15 : vector<128x128xf32>
    %cst_7 = arith.constant 0.000000e+00 : f32
    %17 = vector.broadcast %cst_7 : f32 to vector<128x128xf32>
    %18 = arith.maximumf %16, %17 : vector<128x128xf32>
    %19 = arith.truncf %18 : vector<128x128xf32> to vector<128x128xbf16>
    %c128_i32 = arith.constant 128 : i32
    %20 = arith.muli %arg1, %c128_i32 : i32
    %21 = tpu.assume_multiple %20, 128 : i32
    %22 = arith.index_cast %21 : i32 to index
    %c0_8 = arith.constant 0 : index
    %23 = vector.load %arg14[%22, %c0_8] : memref<256x128xbf16, #tpu.memory_space<vmem>>, vector<128x128xbf16>
    tpu.vector_store %arg14[%22, %c0_8], %19 {strides = array<i32>} : memref<256x128xbf16, #tpu.memory_space<vmem>>, vector<128x128xbf16>,
    %c0_9 = arith.constant 0 : index
    %c0_10 = arith.constant 0 : index
    %24 = vector.load %arg6[%c0_9, %c0_10] : memref<128x256xbf16, #tpu.memory_space<vmem>>, vector<128x256xbf16>
    %cst_11 = arith.constant dense<0.000000e+00> : vector<128x256xf32>
    %25 = tpu.matmul %19, %24, %cst_11 {dimension_numbers = #tpu.dot_dimension_numbers<[1], [0], [0], [1], [0, 0, 1, 1], [], []>} : vector<128x128xbf16>, vector<128x256xbf16>, vector<128x256xf32> -> vector<128x256xf32>
    %26 = arith.truncf %25 : vector<128x256xf32> to vector<128x256xbf16>
    %27 = vector.extract_strided_slice %26 {offsets = [0, 0], sizes = [128, 128], strides = [1, 1]} : vector<128x256xbf16> to vector<128x128xbf16>
    %28 = vector.extract_strided_slice %26 {offsets = [0, 128], sizes = [128, 128], strides = [1, 1]} : vector<128x256xbf16> to vector<128x128xbf16>
    %c0_12 = arith.constant 0 : index
    %c0_13 = arith.constant 0 : index
    %29 = vector.load %arg5[%c0_12, %c0_13] : memref<8x128xbf16, #tpu.memory_space<vmem>>, vector<8x128xbf16>
    %cst_14 = arith.constant dense<0.000000e+00> : vector<8x128xf32>
    %30 = tpu.matmul %29, %27, %cst_14 {dimension_numbers = #tpu.dot_dimension_numbers<[1], [1], [0], [0], [0, 0, 1, 0], [], []>} : vector<8x128xbf16>, vector<128x128xbf16>, vector<8x128xf32> -> vector<8x128xf32>
    %c0_15 = arith.constant 0 : index
    %c0_16 = arith.constant 0 : index
    %31 = vector.load %arg15[%c0_15, %c0_16] : memref<8x1xf32, #tpu.memory_space<vmem>>, vector<8x1xf32>
    %cst_17 = arith.constant dense<0xFF800000> : vector<8xf32>
    %32 = vector.multi_reduction <maximumf>, %30, %cst_17 [1] : vector<8x128xf32> to vector<8xf32>
    %33 = vector.shape_cast %32 : vector<8xf32> to vector<8x1xf32>
    %34 = arith.maximumf %31, %33 : vector<8x1xf32>
    %35 = arith.subf %31, %34 : vector<8x1xf32>
    %36 = math.exp %35 : vector<8x1xf32>
    %37 = vector.broadcast %34 : vector<8x1xf32> to vector<8x128xf32>
    %38 = arith.subf %30, %37 : vector<8x128xf32>
    %39 = math.exp %38 : vector<8x128xf32>
    %c0_18 = arith.constant 0 : index
    %c0_19 = arith.constant 0 : index
    %40 = vector.load %arg16[%c0_18, %c0_19] : memref<8x1xf32, #tpu.memory_space<vmem>>, vector<8x1xf32>
    %41 = arith.mulf %36, %40 : vector<8x1xf32>
    %cst_20 = arith.constant dense<0.000000e+00> : vector<8xf32>
    %42 = vector.multi_reduction <add>, %39, %cst_20 [1] : vector<8x128xf32> to vector<8xf32>
    %43 = vector.shape_cast %42 : vector<8xf32> to vector<8x1xf32>
    %44 = arith.addf %41, %43 : vector<8x1xf32>
    %c0_21 = arith.constant 0 : index
    %c0_22 = arith.constant 0 : index
    %45 = vector.load %arg16[%c0_21, %c0_22] : memref<8x1xf32, #tpu.memory_space<vmem>>, vector<8x1xf32>
    tpu.vector_store %arg16[%c0_21, %c0_22], %44 {strides = array<i32>} : memref<8x1xf32, #tpu.memory_space<vmem>>, vector<8x1xf32>,
    %c0_23 = arith.constant 0 : index
    %c0_24 = arith.constant 0 : index
    %46 = vector.load %arg17[%c0_23, %c0_24] : memref<8x128xf32, #tpu.memory_space<vmem>>, vector<8x128xf32>
    %47 = vector.broadcast %36 : vector<8x1xf32> to vector<8x128xf32>
    %48 = arith.mulf %47, %46 : vector<8x128xf32>
    %49 = arith.truncf %39 : vector<8x128xf32> to vector<8x128xbf16>
    %cst_25 = arith.constant dense<0.000000e+00> : vector<8x128xf32>
    %50 = tpu.matmul %49, %28, %cst_25 {dimension_numbers = #tpu.dot_dimension_numbers<[1], [0], [0], [1], [0, 0, 1, 1], [], []>} : vector<8x128xbf16>, vector<128x128xbf16>, vector<8x128xf32> -> vector<8x128xf32>
    %51 = arith.addf %48, %50 : vector<8x128xf32>
    %c0_26 = arith.constant 0 : index
    %c0_27 = arith.constant 0 : index
    %52 = vector.load %arg17[%c0_26, %c0_27] : memref<8x128xf32, #tpu.memory_space<vmem>>, vector<8x128xf32>
    tpu.vector_store %arg17[%c0_26, %c0_27], %51 {strides = array<i32>} : memref<8x128xf32, #tpu.memory_space<vmem>>, vector<8x128xf32>,
    %c0_28 = arith.constant 0 : index
    %c0_29 = arith.constant 0 : index
    %53 = vector.load %arg15[%c0_28, %c0_29] : memref<8x1xf32, #tpu.memory_space<vmem>>, vector<8x1xf32>
    tpu.vector_store %arg15[%c0_28, %c0_29], %34 {strides = array<i32>} : memref<8x1xf32, #tpu.memory_space<vmem>>, vector<8x1xf32>,
    %c1_i32 = arith.constant 1 : i32
    %54 = arith.cmpi eq, %arg1, %c1_i32 : i32
    %55 = arith.extui %54 : i1 to i32
    %c0_i32_30 = arith.constant 0 : i32
    %56 = arith.cmpi ne, %55, %c0_i32_30 : i32
    scf.if %56 {
      %c0_31 = arith.constant 0 : index
      %c0_32 = arith.constant 0 : index
      %57 = vector.load %arg17[%c0_31, %c0_32] : memref<8x128xf32, #tpu.memory_space<vmem>>, vector<8x128xf32>
      %c0_33 = arith.constant 0 : index
      %c0_34 = arith.constant 0 : index
      %58 = vector.load %arg16[%c0_33, %c0_34] : memref<8x1xf32, #tpu.memory_space<vmem>>, vector<8x1xf32>
      %59 = tpu.reciprocal %58 {approx = true} : vector<8x1xf32> -> vector<8x1xf32>
      %60 = vector.broadcast %59 : vector<8x1xf32> to vector<8x128xf32>
      %61 = arith.mulf %57, %60 : vector<8x128xf32>
      %c0_35 = arith.constant 0 : index
      %c0_36 = arith.constant 0 : index
      %62 = vector.load %arg4[%c0_35, %c0_36] : memref<8x128xf32, #tpu.memory_space<vmem>>, vector<8x128xf32>
      %63 = arith.truncf %61 : vector<8x128xf32> to vector<8x128xbf16>
      %c0_37 = arith.constant 0 : index
      %c0_38 = arith.constant 0 : index
      %64 = vector.load %arg7[%c0_37, %c0_38] : memref<128x128xbf16, #tpu.memory_space<vmem>>, vector<128x128xbf16>
      %cst_39 = arith.constant dense<0.000000e+00> : vector<8x128xf32>
      %65 = tpu.matmul %63, %64, %cst_39 {dimension_numbers = #tpu.dot_dimension_numbers<[1], [0], [0], [1], [0, 0, 1, 1], [], []>} : vector<8x128xbf16>, vector<128x128xbf16>, vector<8x128xf32> -> vector<8x128xf32>
      %66 = arith.addf %62, %65 : vector<8x128xf32>
      %cst_40 = arith.constant dense<0.000000e+00> : vector<8xf32>
      %67 = vector.multi_reduction <add>, %66, %cst_40 [1] : vector<8x128xf32> to vector<8xf32>
      %68 = vector.shape_cast %67 : vector<8xf32> to vector<8x1xf32>
      %cst_41 = arith.constant 1.280000e+02 : f32
      %69 = vector.broadcast %cst_41 : f32 to vector<8x1xf32>
      %70 = arith.divf %68, %69 : vector<8x1xf32>
      %71 = vector.broadcast %70 : vector<8x1xf32> to vector<8x128xf32>
      %72 = arith.subf %66, %71 : vector<8x128xf32>
      %73 = arith.mulf %72, %72 : vector<8x128xf32>
      %cst_42 = arith.constant dense<0.000000e+00> : vector<8xf32>
      %74 = vector.multi_reduction <add>, %73, %cst_42 [1] : vector<8x128xf32> to vector<8xf32>
      %75 = vector.shape_cast %74 : vector<8xf32> to vector<8x1xf32>
      %cst_43 = arith.constant 1.280000e+02 : f32
      %76 = vector.broadcast %cst_43 : f32 to vector<8x1xf32>
      %77 = arith.divf %75, %76 : vector<8x1xf32>
      %78 = vector.broadcast %70 : vector<8x1xf32> to vector<8x128xf32>
      %79 = arith.subf %66, %78 : vector<8x128xf32>
      %cst_44 = arith.constant 9.99999974E-6 : f32
      %80 = vector.broadcast %cst_44 : f32 to vector<8x1xf32>
      %81 = arith.addf %77, %80 : vector<8x1xf32>
      %82 = math.rsqrt %81 : vector<8x1xf32>
      %83 = vector.broadcast %82 : vector<8x1xf32> to vector<8x128xf32>
      %84 = arith.mulf %79, %83 : vector<8x128xf32>
      %85 = vector.broadcast %4 : vector<1x128xf32> to vector<8x128xf32>
      %86 = arith.mulf %84, %85 : vector<8x128xf32>
      %87 = vector.broadcast %5 : vector<1x128xf32> to vector<8x128xf32>
      %88 = arith.addf %86, %87 : vector<8x128xf32>
      %89 = arith.truncf %88 : vector<8x128xf32> to vector<8x128xbf16>
      %c0_45 = arith.constant 0 : index
      %c0_46 = arith.constant 0 : index
      %90 = vector.load %arg8[%c0_45, %c0_46] : memref<128x256xbf16, #tpu.memory_space<vmem>>, vector<128x256xbf16>
      %cst_47 = arith.constant dense<0.000000e+00> : vector<8x256xf32>
      %91 = tpu.matmul %89, %90, %cst_47 {dimension_numbers = #tpu.dot_dimension_numbers<[1], [0], [0], [1], [0, 0, 1, 1], [], []>} : vector<8x128xbf16>, vector<128x256xbf16>, vector<8x256xf32> -> vector<8x256xf32>
      %92 = vector.broadcast %2 : vector<1x256xf32> to vector<8x256xf32>
      %93 = arith.addf %91, %92 : vector<8x256xf32>
      %cst_48 = arith.constant 0.000000e+00 : f32
      %94 = vector.broadcast %cst_48 : f32 to vector<8x256xf32>
      %95 = arith.maximumf %93, %94 : vector<8x256xf32>
      %96 = arith.truncf %95 : vector<8x256xf32> to vector<8x256xbf16>
      %c0_49 = arith.constant 0 : index
      %c0_50 = arith.constant 0 : index
      %97 = vector.load %arg9[%c0_49, %c0_50] : memref<256x128xbf16, #tpu.memory_space<vmem>>, vector<256x128xbf16>
      %cst_51 = arith.constant dense<0.000000e+00> : vector<8x128xf32>
      %98 = tpu.matmul %96, %97, %cst_51 {dimension_numbers = #tpu.dot_dimension_numbers<[1], [0], [0], [1], [0, 0, 1, 1], [], []>} : vector<8x256xbf16>, vector<256x128xbf16>, vector<8x128xf32> -> vector<8x128xf32>
      %99 = arith.addf %88, %98 : vector<8x128xf32>
      %100 = vector.broadcast %3 : vector<1x128xf32> to vector<8x128xf32>
      %101 = arith.addf %99, %100 : vector<8x128xf32>
      %cst_52 = arith.constant dense<0.000000e+00> : vector<8xf32>
      %102 = vector.multi_reduction <add>, %101, %cst_52 [1] : vector<8x128xf32> to vector<8xf32>
      %103 = vector.shape_cast %102 : vector<8xf32> to vector<8x1xf32>
      %cst_53 = arith.constant 1.280000e+02 : f32
      %104 = vector.broadcast %cst_53 : f32 to vector<8x1xf32>
      %105 = arith.divf %103, %104 : vector<8x1xf32>
      %106 = vector.broadcast %105 : vector<8x1xf32> to vector<8x128xf32>
      %107 = arith.subf %101, %106 : vector<8x128xf32>
      %108 = arith.mulf %107, %107 : vector<8x128xf32>
      %cst_54 = arith.constant dense<0.000000e+00> : vector<8xf32>
      %109 = vector.multi_reduction <add>, %108, %cst_54 [1] : vector<8x128xf32> to vector<8xf32>
      %110 = vector.shape_cast %109 : vector<8xf32> to vector<8x1xf32>
      %cst_55 = arith.constant 1.280000e+02 : f32
      %111 = vector.broadcast %cst_55 : f32 to vector<8x1xf32>
      %112 = arith.divf %110, %111 : vector<8x1xf32>
      %113 = vector.broadcast %105 : vector<8x1xf32> to vector<8x128xf32>
      %114 = arith.subf %101, %113 : vector<8x128xf32>
      %cst_56 = arith.constant 9.99999974E-6 : f32
      %115 = vector.broadcast %cst_56 : f32 to vector<8x1xf32>
      %116 = arith.addf %112, %115 : vector<8x1xf32>
      %117 = math.rsqrt %116 : vector<8x1xf32>
      %118 = vector.broadcast %117 : vector<8x1xf32> to vector<8x128xf32>
      %119 = arith.mulf %114, %118 : vector<8x128xf32>
      %120 = vector.broadcast %6 : vector<1x128xf32> to vector<8x128xf32>
      %121 = arith.mulf %119, %120 : vector<8x128xf32>
      %122 = vector.broadcast %7 : vector<1x128xf32> to vector<8x128xf32>
      %123 = arith.addf %121, %122 : vector<8x128xf32>
      %c0_57 = arith.constant 0 : index
      %c0_58 = arith.constant 0 : index
      %c0_59 = arith.constant 0 : index
      %124 = vector.load %arg12[%c0_57, %c0_58, %c0_59] : memref<1x8x128xf32, #tpu.memory_space<vmem>>, vector<1x8x128xf32>
      %125 = vector.shape_cast %124 : vector<1x8x128xf32> to vector<8x128xf32>
      %126 = vector.shape_cast %123 : vector<8x128xf32> to vector<1x8x128xf32>
      tpu.vector_store %arg12[%c0_57, %c0_58, %c0_59], %126 {strides = array<i32>} : memref<1x8x128xf32, #tpu.memory_space<vmem>>, vector<1x8x128xf32>,
      %127 = arith.truncf %123 : vector<8x128xf32> to vector<8x128xbf16>
      %c0_60 = arith.constant 0 : index
      %c0_61 = arith.constant 0 : index
      %128 = vector.load %arg10[%c0_60, %c0_61] : memref<128x128xbf16, #tpu.memory_space<vmem>>, vector<128x128xbf16>
      %cst_62 = arith.constant dense<0.000000e+00> : vector<8x128xf32>
      %129 = tpu.matmul %127, %128, %cst_62 {dimension_numbers = #tpu.dot_dimension_numbers<[1], [0], [0], [1], [0, 0, 1, 1], [], []>} : vector<8x128xbf16>, vector<128x128xbf16>, vector<8x128xf32> -> vector<8x128xf32>
      %130 = arith.truncf %129 : vector<8x128xf32> to vector<8x128xbf16>
      %c0_63 = arith.constant 0 : index
      %c0_64 = arith.constant 0 : index
      %131 = vector.load %arg14[%c0_63, %c0_64] : memref<256x128xbf16, #tpu.memory_space<vmem>>, vector<256x128xbf16>
      %cst_65 = arith.constant dense<0.000000e+00> : vector<8x256xf32>
      %132 = tpu.matmul %130, %131, %cst_65 {dimension_numbers = #tpu.dot_dimension_numbers<[1], [1], [0], [0], [0, 0, 1, 0], [], []>} : vector<8x128xbf16>, vector<256x128xbf16>, vector<8x256xf32> -> vector<8x256xf32>
      %133 = arith.truncf %132 : vector<8x256xf32> to vector<8x256xbf16>
      %c0_66 = arith.constant 0 : index
      %c0_67 = arith.constant 0 : index
      %c0_68 = arith.constant 0 : index
      %134 = vector.load %arg13[%c0_66, %c0_67, %c0_68] : memref<1x8x256xbf16, #tpu.memory_space<vmem>>, vector<1x8x256xbf16>
      %135 = vector.shape_cast %134 : vector<1x8x256xbf16> to vector<8x256xbf16>
      %136 = vector.shape_cast %133 : vector<8x256xbf16> to vector<1x8x256xbf16>
      tpu.vector_store %arg13[%c0_66, %c0_67, %c0_68], %136 {strides = array<i32>} : memref<1x8x256xbf16, #tpu.memory_space<vmem>>, vector<1x8x256xbf16>,
    } else {
    }
    return
  }
  func.func @transform_0(%arg0: i32, %arg1: i32) -> (i32, i32, i32) {
    %c0_i32 = arith.constant 0 : i32
    %c0_i32_0 = arith.constant 0 : i32
    return %arg0, %arg1, %c0_i32 : i32, i32, i32
  }
  func.func @transform_1(%arg0: i32, %arg1: i32) -> (i32, i32) {
    %c0_i32 = arith.constant 0 : i32
    %c0_i32_0 = arith.constant 0 : i32
    %c0_i32_1 = arith.constant 0 : i32
    return %c0_i32, %c0_i32_0 : i32, i32
  }
  func.func @transform_2(%arg0: i32, %arg1: i32) -> (i32, i32) {
    %c0_i32 = arith.constant 0 : i32
    %c0_i32_0 = arith.constant 0 : i32
    %c0_i32_1 = arith.constant 0 : i32
    return %c0_i32, %c0_i32_0 : i32, i32
  }
  func.func @transform_3(%arg0: i32, %arg1: i32) -> (i32, i32) {
    %c0_i32 = arith.constant 0 : i32
    %c0_i32_0 = arith.constant 0 : i32
    %c0_i32_1 = arith.constant 0 : i32
    return %c0_i32, %c0_i32_0 : i32, i32
  }
  func.func @transform_4(%arg0: i32, %arg1: i32) -> (i32, i32) {
    %c0_i32 = arith.constant 0 : i32
    %c0_i32_0 = arith.constant 0 : i32
    %c0_i32_1 = arith.constant 0 : i32
    return %c0_i32, %c0_i32_0 : i32, i32
  }
  func.func @transform_5(%arg0: i32, %arg1: i32) -> (i32, i32) {
    %c0_i32 = arith.constant 0 : i32
    %c0_i32_0 = arith.constant 0 : i32
    %c0_i32_1 = arith.constant 0 : i32
    return %c0_i32, %c0_i32_0 : i32, i32
  }
  func.func @transform_6(%arg0: i32, %arg1: i32) -> (i32, i32) {
    %c0_i32 = arith.constant 0 : i32
    %c0_i32_0 = arith.constant 0 : i32
    %c0_i32_1 = arith.constant 0 : i32
    return %c0_i32, %c0_i32_0 : i32, i32
  }
  func.func @transform_7(%arg0: i32, %arg1: i32) -> (i32, i32) {
    %c0_i32 = arith.constant 0 : i32
    %c0_i32_0 = arith.constant 0 : i32
    %c0_i32_1 = arith.constant 0 : i32
    return %c0_i32, %c0_i32_0 : i32, i32
  }
  func.func @transform_8(%arg0: i32, %arg1: i32) -> (i32, i32) {
    %c0_i32 = arith.constant 0 : i32
    %c0_i32_0 = arith.constant 0 : i32
    %c0_i32_1 = arith.constant 0 : i32
    return %c0_i32, %c0_i32_0 : i32, i32
  }
  func.func @transform_9(%arg0: i32, %arg1: i32) -> (i32, i32) {
    %c0_i32 = arith.constant 0 : i32
    %c0_i32_0 = arith.constant 0 : i32
    %c0_i32_1 = arith.constant 0 : i32
    return %c0_i32, %c0_i32_0 : i32, i32
  }
  func.func @transform_10(%arg0: i32, %arg1: i32) -> (i32, i32, i32) {
    %c0_i32 = arith.constant 0 : i32
    %c0_i32_0 = arith.constant 0 : i32
    %c0_i32_1 = arith.constant 0 : i32
    return %arg0, %c0_i32, %c0_i32_0 : i32, i32, i32
  }
  func.func @transform_11(%arg0: i32, %arg1: i32) -> (i32, i32, i32) {
    %c0_i32 = arith.constant 0 : i32
    %c0_i32_0 = arith.constant 0 : i32
    %c0_i32_1 = arith.constant 0 : i32
    return %arg0, %c0_i32, %c0_i32_0 : i32, i32, i32
  }
}

</mosaic_0001>

<llo_original>
// kernel: _m2t2_forward.1
$region0: #{_m2t2_forward.1}
  #allocation0 [shape = 'u32[]', space=smem, size = 0x4, offset = 0x4, fixed_abs, tag = 'smem constant byte address 0x4 - core index']
  #allocation1 [shape = 'u32[72,128]{1,0:T(1,128)}', space=vmem, size = 0x9000, scoped, tag = 'internal scratch']
  #allocation2 [shape = 'bf16[256,128]{1,0:T(8,128)(2,1)}', space=vmem, size = 0x10000, scoped, tag = 'scratch operand']
  #allocation3 [shape = 'f32[8,1]{1,0:T(8,128)}', space=vmem, size = 0x1000, scoped, tag = 'scratch operand']
  #allocation4 [shape = 'f32[8,1]{1,0:T(8,128)}', space=vmem, size = 0x1000, scoped, tag = 'scratch operand']
  #allocation5 [shape = 'f32[8,128]{1,0:T(8,128)}', space=vmem, size = 0x1000, scoped, tag = 'scratch operand']
  %s0 = inlined_call_operand.vmem [shape: bf16[2,256,64], index: 0, kind: input, shape index: {}]
  %s1 = inlined_call_operand.vmem [shape: bf16[64,128], index: 1, kind: input, shape index: {}]
  %s2 = inlined_call_operand.hbm [shape: f32[8,128], index: 2, kind: input, shape index: {}]
  %s3 = inlined_call_operand.vmem [shape: bf16[8,128], index: 3, kind: input, shape index: {}]
  %s4 = inlined_call_operand.vmem [shape: bf16[128,256], index: 4, kind: input, shape index: {}]
  %s5 = inlined_call_operand.hbm [shape: bf16[128,128], index: 5, kind: input, shape index: {}]
  %s6 = inlined_call_operand.vmem [shape: bf16[128,256], index: 6, kind: input, shape index: {}]
  %s7 = inlined_call_operand.hbm [shape: bf16[256,128], index: 7, kind: input, shape index: {}]
  %s8 = inlined_call_operand.hbm [shape: bf16[128,128], index: 8, kind: input, shape index: {}]
  %s9 = inlined_call_operand.hbm [shape: f32[8,256], index: 9, kind: input, shape index: {}]
  %s10 = inlined_call_operand.vmem [shape: f32[2,8,128], index: 10, kind: output, shape index: {0}]
  %s11 = inlined_call_operand.hbm [shape: bf16[2,8,256], index: 11, kind: output, shape index: {1}]
  %12 = xla_tuple %s10, %s11
  %s13 = sld [smem:[#allocation0]]
  $region109: #{_m2t2_forward.1} parent=0
    _
  %s15 = ssub.s32 1, %s13
  %s16 = scalar_select 0, %s15, %s13
  $region1: #{_m2t2_forward.1} parent=0
    #allocation6 [shape = 'u8[4096]{0}', space=vmem, size = 0x1000, scoped, tag = 'input window, operand 2, single buffered']
    #allocation7 [shape = 's32[2]{0}', space=sflag, size = 0x8, scoped, tag = 'scoped memory for _m2t2_forward.1']
    #allocation8 [shape = 's32[2]{0}', space=sflag, size = 0x8, scoped, tag = 'scoped memory for _m2t2_forward.1']
    #allocation9 [shape = 'u8[32768]{0}', space=vmem, size = 0x8000, scoped, tag = 'input window, operand 5, single buffered']
    #allocation10 [shape = 's32[1]{0}', space=sflag, size = 0x4, scoped, tag = 'scoped memory for _m2t2_forward.1']
    #allocation11 [shape = 'u8[65536]{0}', space=vmem, size = 0x10000, scoped, tag = 'input window, operand 7, single buffered']
    #allocation12 [shape = 'u8[32768]{0}', space=vmem, size = 0x8000, scoped, tag = 'input window, operand 8, single buffered']
    #allocation13 [shape = 's32[1]{0}', space=sflag, size = 0x4, scoped, tag = 'scoped memory for _m2t2_forward.1']
    #allocation14 [shape = 'u8[8192]{0}', space=vmem, size = 0x2000, scoped, tag = 'input window, operand 9, single buffered']
    #allocation15 [shape = 'u8[8192]{0}', space=vmem, size = 0x2000, scoped, tag = 'output window, operand 1']
    %17 = vsyncpa [#allocation7], 0
    %18 = vsyncpa [#allocation10], 0
    %19 = vsyncpa [#allocation13], 0
    %20 = vsyncpa [#allocation8], 0
    %s21 = scalar_lea.sflag [#allocation8], 1
    %22 = vsyncpa %s21, 0
    loop: start=0, step=1, limit=6
    $region2: #{_m2t2_forward.1} parent=1 // loop_pre_header
      _
    $region3: #{_m2t2_forward.1} parent=1 // loop_header
      %s24 = sphi 0, %s28
      %p25 = scmp.ge.s32.totalorder %s24, 6
      %s31 = sphi 0, %s43
      %s32 = sphi 0, %s39
      %s33 = sphi 0, %s31
      %s34 = sphi 0, %s32
      %s35 = sphi 0, %s33
      %s36 = sphi 0, %s34
      %s48 = sphi 0, %s50
      %s51 = sphi 0, %s48
      %s52 = sphi 0, %s51
      %s68 = sphi 0, %s52
      %s72 = sphi 0, %s72
      %s74 = sphi 0, %s72
      %s75 = sphi 0, %s74
      %s89 = sphi 0, %s75
      %s93 = sphi 0, %s93
      %s95 = sphi 0, %s93
      %s96 = sphi 0, %s95
      %s110 = sphi 0, %s96
      %s114 = sphi 0, %s114
      %s116 = sphi 0, %s114
      %s117 = sphi 0, %s116
      %s131 = sphi 0, %s117
      %s135 = sphi 0, %s135
      %s137 = sphi 0, %s135
      %s138 = sphi 0, %s137
      %s152 = sphi 0, %s138
      %s156 = sphi 0, %s156
      %s158 = sphi 0, %s156
      %s159 = sphi 0, %s158
      %s173 = sphi 0, %s159
      %s177 = sphi 0, %s177
      %s179 = sphi 0, %s177
      %s180 = sphi 0, %s179
      %s194 = sphi 0, %s180
      %s198 = sphi 0, %s198
      %s200 = sphi 0, %s198
      %s201 = sphi 0, %s200
      %s215 = sphi 0, %s201
      %s219 = sphi 0, %s219
      %s221 = sphi 0, %s219
      %s222 = sphi 0, %s221
      %s236 = sphi 0, %s222
      %s240 = sphi 0, %s240
      %s242 = sphi 0, %s240
      %s243 = sphi 0, %s242
      %s257 = sphi 0, %s243
      %s263 = sphi 0, %s265
      %s266 = sphi 0, %s263
      %s267 = sphi 0, %s266
      %s283 = sphi 0, %s267
      %s289 = sphi 0, %s291
      %s292 = sphi 0, %s289
      %s293 = sphi 0, %s292
      %s309 = sphi 0, %s293
    $region4: #{_m2t2_forward.1} parent=1 // loop_header_branch
      %27 = sbr.rel (%p25) target = $region8
    $region5: #{_m2t2_forward.1} parent=1 // loop_body
      %s29 = ssub.s32 %s24, 1
      %s30 = ssub.s32 %s24, 2
      %s37 = sadd.s32 1, %s32
      %p38 = scmp.ge.s32.totalorder %s37, 2
      %s39 = scalar_select %p38, 0, %s37
      %s40 = sadd.s32 1, %s31
      %s41 = scalar_select %p38, %s40, %s31
      %p42 = scmp.ge.s32.totalorder %s41, 2
      %s43 = scalar_select %p42, 0, %s41
      %s44 = ssub.s32 %s31, %s43
      %s45 = ssub.s32 %s32, %s39
      %s46 = sor.u32 %s44, %s45
      %p47 = scmp.eq.s32.totalorder %s46, 0
      %s49 = sadd.s32 %s48, 1
      %s50 = scalar_select %p47, %s48, %s49
      %p53 = pneg %p47
      %p54 = scmp.eq.s32.totalorder %s24, 3
      %p55 = por %p53, %p54
      %p56 = scmp.ne.s32.totalorder %s48, %s51
      %p57 = scmp.eq.s32.totalorder %s24, 0
      %p58 = por %p56, %p57
      %p59 = scmp.ne.s32.totalorder %s48, %s51
      %p60 = scmp.eq.s32.totalorder %s29, 3
      %p61 = por %p59, %p60
      %p62 = scmp.ne.s32.totalorder %s51, %s52
      %p63 = scmp.eq.s32.totalorder %s29, 0
      %p64 = por %p62, %p63
      %p65 = scmp.ne.s32.totalorder %s51, %s52
      %p66 = scmp.eq.s32.totalorder %s30, 3
      %p67 = por %p65, %p66
      %p69 = scmp.ne.s32.totalorder %s52, %s68
      %p70 = scmp.eq.s32.totalorder %s30, 0
      %p71 = por %p69, %p70
      %s73 = sadd.s32 %s72, 1
      %p76 = scmp.eq.s32.totalorder %s24, 3
      %p77 = scmp.ne.s32.totalorder %s72, %s74
      %p78 = scmp.eq.s32.totalorder %s24, 0
      %p79 = por %p77, %p78
      %p80 = scmp.ne.s32.totalorder %s72, %s74
      %p81 = scmp.eq.s32.totalorder %s29, 3
      %p82 = por %p80, %p81
      %p83 = scmp.ne.s32.totalorder %s74, %s75
      %p84 = scmp.eq.s32.totalorder %s29, 0
      %p85 = por %p83, %p84
      %p86 = scmp.ne.s32.totalorder %s74, %s75
      %p87 = scmp.eq.s32.totalorder %s30, 3
      %p88 = por %p86, %p87
      %p90 = scmp.ne.s32.totalorder %s75, %s89
      %p91 = scmp.eq.s32.totalorder %s30, 0
      %p92 = por %p90, %p91
      %s94 = sadd.s32 %s93, 1
      %p97 = scmp.eq.s32.totalorder %s24, 3
      %p98 = scmp.ne.s32.totalorder %s93, %s95
      %p99 = scmp.eq.s32.totalorder %s24, 0
      %p100 = por %p98, %p99
      %p101 = scmp.ne.s32.totalorder %s93, %s95
      %p102 = scmp.eq.s32.totalorder %s29, 3
      %p103 = por %p101, %p102
      %p104 = scmp.ne.s32.totalorder %s95, %s96
      %p105 = scmp.eq.s32.totalorder %s29, 0
      %p106 = por %p104, %p105
      %p107 = scmp.ne.s32.totalorder %s95, %s96
      %p108 = scmp.eq.s32.totalorder %s30, 3
      %p109 = por %p107, %p108
      %p111 = scmp.ne.s32.totalorder %s96, %s110
      %p112 = scmp.eq.s32.totalorder %s30, 0
      %p113 = por %p111, %p112
      %s115 = sadd.s32 %s114, 1
      %p118 = scmp.eq.s32.totalorder %s24, 3
      %p119 = scmp.ne.s32.totalorder %s114, %s116
      %p120 = scmp.eq.s32.totalorder %s24, 0
      %p121 = por %p119, %p120
      %p122 = scmp.ne.s32.totalorder %s114, %s116
      %p123 = scmp.eq.s32.totalorder %s29, 3
      %p124 = por %p122, %p123
      %p125 = scmp.ne.s32.totalorder %s116, %s117
      %p126 = scmp.eq.s32.totalorder %s29, 0
      %p127 = por %p125, %p126
      %p128 = scmp.ne.s32.totalorder %s116, %s117
      %p129 = scmp.eq.s32.totalorder %s30, 3
      %p130 = por %p128, %p129
      %p132 = scmp.ne.s32.totalorder %s117, %s131
      %p133 = scmp.eq.s32.totalorder %s30, 0
      %p134 = por %p132, %p133
      %s136 = sadd.s32 %s135, 1
      %p139 = scmp.eq.s32.totalorder %s24, 3
      %p140 = scmp.ne.s32.totalorder %s135, %s137
      %p141 = scmp.eq.s32.totalorder %s24, 0
      %p142 = por %p140, %p141
      %p143 = scmp.ne.s32.totalorder %s135, %s137
      %p144 = scmp.eq.s32.totalorder %s29, 3
      %p145 = por %p143, %p144
      %p146 = scmp.ne.s32.totalorder %s137, %s138
      %p147 = scmp.eq.s32.totalorder %s29, 0
      %p148 = por %p146, %p147
      %p149 = scmp.ne.s32.totalorder %s137, %s138
      %p150 = scmp.eq.s32.totalorder %s30, 3
      %p151 = por %p149, %p150
      %p153 = scmp.ne.s32.totalorder %s138, %s152
      %p154 = scmp.eq.s32.totalorder %s30, 0
      %p155 = por %p153, %p154
      %s157 = sadd.s32 %s156, 1
      %p160 = scmp.eq.s32.totalorder %s24, 3
      %p161 = scmp.ne.s32.totalorder %s156, %s158
      %p162 = scmp.eq.s32.totalorder %s24, 0
      %p163 = por %p161, %p162
      %p164 = scmp.ne.s32.totalorder %s156, %s158
      %p165 = scmp.eq.s32.totalorder %s29, 3
      %p166 = por %p164, %p165
      %p167 = scmp.ne.s32.totalorder %s158, %s159
      %p168 = scmp.eq.s32.totalorder %s29, 0
      %p169 = por %p167, %p168
      %p170 = scmp.ne.s32.totalorder %s158, %s159
      %p171 = scmp.eq.s32.totalorder %s30, 3
      %p172 = por %p170, %p171
      %p174 = scmp.ne.s32.totalorder %s159, %s173
      %p175 = scmp.eq.s32.totalorder %s30, 0
      %p176 = por %p174, %p175
      %s178 = sadd.s32 %s177, 1
      %p181 = scmp.eq.s32.totalorder %s24, 3
      %p182 = scmp.ne.s32.totalorder %s177, %s179
      %p183 = scmp.eq.s32.totalorder %s24, 0
      %p184 = por %p182, %p183
      %p185 = scmp.ne.s32.totalorder %s177, %s179
      %p186 = scmp.eq.s32.totalorder %s29, 3
      %p187 = por %p185, %p186
      %p188 = scmp.ne.s32.totalorder %s179, %s180
      %p189 = scmp.eq.s32.totalorder %s29, 0
      %p190 = por %p188, %p189
      %p191 = scmp.ne.s32.totalorder %s179, %s180
      %p192 = scmp.eq.s32.totalorder %s30, 3
      %p193 = por %p191, %p192
      %p195 = scmp.ne.s32.totalorder %s180, %s194
      %p196 = scmp.eq.s32.totalorder %s30, 0
      %p197 = por %p195, %p196
      %s199 = sadd.s32 %s198, 1
      %p202 = scmp.eq.s32.totalorder %s24, 3
      %p203 = scmp.ne.s32.totalorder %s198, %s200
      %p204 = scmp.eq.s32.totalorder %s24, 0
      %p205 = por %p203, %p204
      %p206 = scmp.ne.s32.totalorder %s198, %s200
      %p207 = scmp.eq.s32.totalorder %s29, 3
      %p208 = por %p206, %p207
      %p209 = scmp.ne.s32.totalorder %s200, %s201
      %p210 = scmp.eq.s32.totalorder %s29, 0
      %p211 = por %p209, %p210
      %p212 = scmp.ne.s32.totalorder %s200, %s201
      %p213 = scmp.eq.s32.totalorder %s30, 3
      %p214 = por %p212, %p213
      %p216 = scmp.ne.s32.totalorder %s201, %s215
      %p217 = scmp.eq.s32.totalorder %s30, 0
      %p218 = por %p216, %p217
      %s220 = sadd.s32 %s219, 1
      %p223 = scmp.eq.s32.totalorder %s24, 3
      %p224 = scmp.ne.s32.totalorder %s219, %s221
      %p225 = scmp.eq.s32.totalorder %s24, 0
      %p226 = por %p224, %p225
      %p227 = scmp.ne.s32.totalorder %s219, %s221
      %p228 = scmp.eq.s32.totalorder %s29, 3
      %p229 = por %p227, %p228
      %p230 = scmp.ne.s32.totalorder %s221, %s222
      %p231 = scmp.eq.s32.totalorder %s29, 0
      %p232 = por %p230, %p231
      %p233 = scmp.ne.s32.totalorder %s221, %s222
      %p234 = scmp.eq.s32.totalorder %s30, 3
      %p235 = por %p233, %p234
      %p237 = scmp.ne.s32.totalorder %s222, %s236
      %p238 = scmp.eq.s32.totalorder %s30, 0
      %p239 = por %p237, %p238
      %s241 = sadd.s32 %s240, 1
      %p244 = scmp.eq.s32.totalorder %s24, 3
      %p245 = scmp.ne.s32.totalorder %s240, %s242
      %p246 = scmp.eq.s32.totalorder %s24, 0
      %p247 = por %p245, %p246
      %p248 = scmp.ne.s32.totalorder %s240, %s242
      %p249 = scmp.eq.s32.totalorder %s29, 3
      %p250 = por %p248, %p249
      %p251 = scmp.ne.s32.totalorder %s242, %s243
      %p252 = scmp.eq.s32.totalorder %s29, 0
      %p253 = por %p251, %p252
      %p254 = scmp.ne.s32.totalorder %s242, %s243
      %p255 = scmp.eq.s32.totalorder %s30, 3
      %p256 = por %p254, %p255
      %p258 = scmp.ne.s32.totalorder %s243, %s257
      %p259 = scmp.eq.s32.totalorder %s30, 0
      %p260 = por %p258, %p259
      %s261 = ssub.s32 %s31, %s43
      %p262 = scmp.eq.s32.totalorder %s261, 0
      %s264 = sadd.s32 %s263, 1
      %s265 = scalar_select %p262, %s263, %s264
      %p268 = pneg %p262
      %p269 = scmp.eq.s32.totalorder %s24, 3
      %p270 = por %p268, %p269
      %p271 = scmp.ne.s32.totalorder %s263, %s266
      %p272 = scmp.eq.s32.totalorder %s24, 0
      %p273 = por %p271, %p272
      %p274 = scmp.ne.s32.totalorder %s263, %s266
      %p275 = scmp.eq.s32.totalorder %s29, 3
      %p276 = por %p274, %p275
      %p277 = scmp.ne.s32.totalorder %s266, %s267
      %p278 = scmp.eq.s32.totalorder %s29, 0
      %p279 = por %p277, %p278
      %p280 = scmp.ne.s32.totalorder %s266, %s267
      %p281 = scmp.eq.s32.totalorder %s30, 3
      %p282 = por %p280, %p281
      %p284 = scmp.ne.s32.totalorder %s267, %s283
      %p285 = scmp.eq.s32.totalorder %s30, 0
      %p286 = por %p284, %p285
      %s287 = ssub.s32 %s31, %s43
      %p288 = scmp.eq.s32.totalorder %s287, 0
      %s290 = sadd.s32 %s289, 1
      %s291 = scalar_select %p288, %s289, %s290
      %p294 = pneg %p288
      %p295 = scmp.eq.s32.totalorder %s24, 3
      %p296 = por %p294, %p295
      %p297 = scmp.ne.s32.totalorder %s289, %s292
      %p298 = scmp.eq.s32.totalorder %s24, 0
      %p299 = por %p297, %p298
      %p300 = scmp.ne.s32.totalorder %s289, %s292
      %p301 = scmp.eq.s32.totalorder %s29, 3
      %p302 = por %p300, %p301
      %p303 = scmp.ne.s32.totalorder %s292, %s293
      %p304 = scmp.eq.s32.totalorder %s29, 0
      %p305 = por %p303, %p304
      %p306 = scmp.ne.s32.totalorder %s292, %s293
      %p307 = scmp.eq.s32.totalorder %s30, 3
      %p308 = por %p306, %p307
      %p310 = scmp.ne.s32.totalorder %s293, %s309
      %p311 = scmp.eq.s32.totalorder %s30, 0
      %p312 = por %p310, %p311
      %p313 = scmp.le.s32.totalorder 1, %s24
      %p314 = scmp.lt.s32.totalorder %s24, 5
      %p315 = pnand %p313, %p314
      %p316 = pneg %p315
      // Predicated region
      $region9: #{_m2t2_forward.1} parent=5 // pred_check
        _
      $region10: #{_m2t2_forward.1} parent=5 // pred_check_branch
        %318 = sbr.rel (%p315) target = $region12
      $region11: #{_m2t2_forward.1} parent=5 // pred_region
        %s319 = ssub.s32 %s24, 1
        // Predicated region
        $region13: #{_m2t2_forward.1} parent=11 // pred_check
          %p320 = pneg %p85
        $region14: #{_m2t2_forward.1} parent=11 // pred_check_branch
          %322 = sbr.rel (%p320) target = $region16
        $region15: #{_m2t2_forward.1} parent=11 // pred_region
          _
        $region16: #{_m2t2_forward.1} parent=11 // pred_fallthru
          _
        // Predicated region
        $region17: #{_m2t2_forward.1} parent=11 // pred_check
          %p323 = pneg %p106
        $region18: #{_m2t2_forward.1} parent=11 // pred_check_branch
          %325 = sbr.rel (%p323) target = $region20
        $region19: #{_m2t2_forward.1} parent=11 // pred_region
          %327 = vsyncadd [#allocation7], 0
          %s329 = sshll.u32 %s2, 4
          %s330 = int_to_ptr.hbm [resolvable:$true] %s329
          %s331 = sshll.u32 [#allocation6], 4
          %s332 = int_to_ptr.vmem [resolvable:$true] %s331
          %334 = dma.hbm_to_vmem [thread:$0]  %s330, 128, %s332, [#allocation7]
        $region20: #{_m2t2_forward.1} parent=11 // pred_fallthru
          _
        // Predicated region
        $region21: #{_m2t2_forward.1} parent=11 // pred_check
          %p335 = pneg %p127
        $region22: #{_m2t2_forward.1} parent=11 // pred_check_branch
          %337 = sbr.rel (%p335) target = $region24
        $region23: #{_m2t2_forward.1} parent=11 // pred_region
          _
        $region24: #{_m2t2_forward.1} parent=11 // pred_fallthru
          _
        // Predicated region
        $region25: #{_m2t2_forward.1} parent=11 // pred_check
          %p338 = pneg %p148
        $region26: #{_m2t2_forward.1} parent=11 // pred_check_branch
          %340 = sbr.rel (%p338) target = $region28
        $region27: #{_m2t2_forward.1} parent=11 // pred_region
          _
        $region28: #{_m2t2_forward.1} parent=11 // pred_fallthru
          _
        // Predicated region
        $region29: #{_m2t2_forward.1} parent=11 // pred_check
          %p341 = pneg %p169
        $region30: #{_m2t2_forward.1} parent=11 // pred_check_branch
          %343 = sbr.rel (%p341) target = $region32
        $region31: #{_m2t2_forward.1} parent=11 // pred_region
          %345 = vsyncadd [#allocation10], 0
          %s346 = sshll.u32 %s5, 4
          %s347 = int_to_ptr.hbm [resolvable:$true] %s346
          %s348 = sshll.u32 [#allocation9], 4
          %s349 = int_to_ptr.vmem [resolvable:$true] %s348
          %354 = dma.hbm_to_vmem [thread:$0]  %s347, 1024, %s349, [#allocation10], 64, 64, 4
        $region32: #{_m2t2_forward.1} parent=11 // pred_fallthru
          _
        // Predicated region
        $region33: #{_m2t2_forward.1} parent=11 // pred_check
          %p355 = pneg %p190
        $region34: #{_m2t2_forward.1} parent=11 // pred_check_branch
          %357 = sbr.rel (%p355) target = $region36
        $region35: #{_m2t2_forward.1} parent=11 // pred_region
          _
        $region36: #{_m2t2_forward.1} parent=11 // pred_fallthru
          _
        // Predicated region
        $region37: #{_m2t2_forward.1} parent=11 // pred_check
          %p358 = pneg %p211
        $region38: #{_m2t2_forward.1} parent=11 // pred_check_branch
          %360 = sbr.rel (%p358) target = $region40
        $region39: #{_m2t2_forward.1} parent=11 // pred_region
          %362 = vsyncadd [#allocation10], 0
          %s363 = sshll.u32 %s7, 4
          %s364 = int_to_ptr.hbm [resolvable:$true] %s363
          %s365 = sshll.u32 [#allocation11], 4
          %s366 = int_to_ptr.vmem [resolvable:$true] %s365
          %371 = dma.hbm_to_vmem [thread:$0]  %s364, 2048, %s366, [#allocation10], 64, 64, 4
        $region40: #{_m2t2_forward.1} parent=11 // pred_fallthru
          _
        // Predicated region
        $region41: #{_m2t2_forward.1} parent=11 // pred_check
          %p372 = pneg %p232
        $region42: #{_m2t2_forward.1} parent=11 // pred_check_branch
          %374 = sbr.rel (%p372) target = $region44
        $region43: #{_m2t2_forward.1} parent=11 // pred_region
          %376 = vsyncadd [#allocation13], 0
          %s377 = sshll.u32 %s8, 4
          %s378 = int_to_ptr.hbm [resolvable:$true] %s377
          %s379 = sshll.u32 [#allocation12], 4
          %s380 = int_to_ptr.vmem [resolvable:$true] %s379
          %385 = dma.hbm_to_vmem [thread:$0]  %s378, 1024, %s380, [#allocation13], 64, 64, 4
        $region44: #{_m2t2_forward.1} parent=11 // pred_fallthru
          _
        // Predicated region
        $region45: #{_m2t2_forward.1} parent=11 // pred_check
          %p386 = pneg %p253
        $region46: #{_m2t2_forward.1} parent=11 // pred_check_branch
          %388 = sbr.rel (%p386) target = $region48
        $region47: #{_m2t2_forward.1} parent=11 // pred_region
          %390 = vsyncadd [#allocation13], 0
          %s392 = sshll.u32 %s9, 4
          %s393 = int_to_ptr.hbm [resolvable:$true] %s392
          %s394 = sshll.u32 [#allocation14], 4
          %s395 = int_to_ptr.vmem [resolvable:$true] %s394
          %397 = dma.hbm_to_vmem [thread:$0]  %s393, 256, %s395, [#allocation13]
        $region48: #{_m2t2_forward.1} parent=11 // pred_fallthru
          _
      $region12: #{_m2t2_forward.1} parent=5 // pred_fallthru
        _
      %p398 = scmp.lt.s32.totalorder %s24, 4
      // Predicated region
      $region49: #{_m2t2_forward.1} parent=5 // pred_check
        %p399 = pneg %p398
      $region50: #{_m2t2_forward.1} parent=5 // pred_check_branch
        %401 = sbr.rel (%p399) target = $region52
      $region51: #{_m2t2_forward.1} parent=5 // pred_region
        // Predicated region
        $region53: #{_m2t2_forward.1} parent=51 // pred_check
          %p402 = pneg %p58
        $region54: #{_m2t2_forward.1} parent=51 // pred_check_branch
          %404 = sbr.rel (%p402) target = $region56
        $region55: #{_m2t2_forward.1} parent=51 // pred_region
          %s405 = smul.u32 16, %s32
          %p406 = scmp.lt.s32.totalorder %s31, 1
          %s407 = scalar_select %p406, %s31, 1
          %p408 = scmp.lt.s32.totalorder %s405, 31
          %s409 = scalar_select %p408, %s405, 31
          %s410 = smul.addr %s407, 32
          %s411 = sadd.s32 %s409, %s410
          %s412 = smul.addr %s411, 4
          %s413 = scalar_lea.vmem %s0, %s412
          %s414 = smul.u32 16, %s32
        $region56: #{_m2t2_forward.1} parent=51 // pred_fallthru
          _
      $region52: #{_m2t2_forward.1} parent=5 // pred_fallthru
        _
      %p415 = scmp.le.s32.totalorder 1, %s24
      %p416 = scmp.lt.s32.totalorder %s24, 5
      %p417 = pnand %p415, %p416
      %p418 = pneg %p417
      // Predicated region
      $region57: #{_m2t2_forward.1} parent=5 // pred_check
        _
      $region58: #{_m2t2_forward.1} parent=5 // pred_check_branch
        %420 = sbr.rel (%p417) target = $region60
      $region59: #{_m2t2_forward.1} parent=5 // pred_region
        %s421 = ssub.s32 %s24, 1
        // Predicated region
        $region61: #{_m2t2_forward.1} parent=59 // pred_check
          %p422 = pneg %p106
        $region62: #{_m2t2_forward.1} parent=59 // pred_check_branch
          %424 = sbr.rel (%p422) target = $region64
        $region63: #{_m2t2_forward.1} parent=59 // pred_region
          %426 = dma.done [#allocation7], 128
        $region64: #{_m2t2_forward.1} parent=59 // pred_fallthru
          _
        // Predicated region
        $region65: #{_m2t2_forward.1} parent=59 // pred_check
          %p427 = pneg %p169
        $region66: #{_m2t2_forward.1} parent=59 // pred_check_branch
          %429 = sbr.rel (%p427) target = $region68
        $region67: #{_m2t2_forward.1} parent=59 // pred_region
          %431 = dma.done [#allocation10], 1024
        $region68: #{_m2t2_forward.1} parent=59 // pred_fallthru
          _
        // Predicated region
        $region69: #{_m2t2_forward.1} parent=59 // pred_check
          %p432 = pneg %p211
        $region70: #{_m2t2_forward.1} parent=59 // pred_check_branch
          %434 = sbr.rel (%p432) target = $region72
        $region71: #{_m2t2_forward.1} parent=59 // pred_region
          %436 = dma.done [#allocation10], 2048
        $region72: #{_m2t2_forward.1} parent=59 // pred_fallthru
          _
        // Predicated region
        $region73: #{_m2t2_forward.1} parent=59 // pred_check
          %p437 = pneg %p232
        $region74: #{_m2t2_forward.1} parent=59 // pred_check_branch
          %439 = sbr.rel (%p437) target = $region76
        $region75: #{_m2t2_forward.1} parent=59 // pred_region
          %441 = dma.done [#allocation13], 1024
        $region76: #{_m2t2_forward.1} parent=59 // pred_fallthru
          _
        // Predicated region
        $region77: #{_m2t2_forward.1} parent=59 // pred_check
          %p442 = pneg %p253
        $region78: #{_m2t2_forward.1} parent=59 // pred_check_branch
          %444 = sbr.rel (%p442) target = $region80
        $region79: #{_m2t2_forward.1} parent=59 // pred_region
          %446 = dma.done [#allocation13], 256
        $region80: #{_m2t2_forward.1} parent=59 // pred_fallthru
          _
        %s447 = smul.u32 16, %s34
        %p448 = scmp.lt.s32.totalorder %s33, 1
        %s449 = scalar_select %p448, %s33, 1
        %p450 = scmp.lt.s32.totalorder %s447, 31
        %s451 = scalar_select %p450, %s447, 31
        %s452 = smul.addr %s449, 32
        %s453 = sadd.s32 %s451, %s452
        %s454 = smul.addr %s453, 4
        %s455 = scalar_lea.vmem %s0, %s454
        %p456 = pneg %p64
        %p457 = pneg %p61
        %p458 = pneg %p85
        %p459 = pneg %p82
        %p460 = pneg %p106
        %p461 = pneg %p103
        %p462 = pneg %p127
        %p463 = pneg %p124
        %p464 = pneg %p148
        %p465 = pneg %p145
        %p466 = pneg %p169
        %p467 = pneg %p166
        %p468 = pneg %p190
        %p469 = pneg %p187
        %p470 = pneg %p211
        %p471 = pneg %p208
        %p472 = pneg %p232
        %p473 = pneg %p229
        %p474 = pneg %p253
        %p475 = pneg %p250
        %p476 = pneg %p279
        %p477 = pneg %p276
        %p478 = scmp.lt.s32.totalorder %s33, 1
        %s479 = scalar_select %p478, %s33, 1
        %s480 = smul.addr %s479, 8
        %s481 = scalar_lea.vmem %s10, %s480
        %p482 = pneg %p305
        %p483 = pneg %p302
        %s484 = sand.u32 %s292, 1
        %s485 = scalar_lea.sflag [#allocation8], %s484
        %s486 = sand.u32 %s292, 1
        %s487 = smul.addr %s486, 8
        %s488 = scalar_lea.vmem [#allocation15], %s487
        %s489 = smul.u32 16, %s34
        %p490 = scmp.lt.s32.totalorder %s33, 1
        %s491 = scalar_select %p490, %s33, 1
        %p492 = scmp.lt.s32.totalorder %s489, 31
        %s493 = scalar_select %p492, %s489, 31
        %s494 = smul.addr %s491, 32
        %s495 = sadd.s32 %s493, %s494
        %s496 = smul.addr %s495, 4
        %s497 = scalar_lea.vmem %s0, %s496
        %s498 = smul.u32 16, %s34
        %p499 = scmp.lt.s32.totalorder %s33, 1
        %s500 = scalar_select %p499, %s33, 1
        %s501 = smul.addr %s500, 8
        %s502 = scalar_lea.vmem %s10, %s501
        %v504 = vld [vmem:[#allocation14] sm:$0xff]
        %v505 = vld [vmem:[#allocation14 + $0x8] sm:$0xff]
        %p506 = scmp.eq.s32.totalorder %s34, 0
        // Predicated region
        $region81: #{_m2t2_forward.1} parent=59 // pred_check
          %p507 = pneg %p506
        $region82: #{_m2t2_forward.1} parent=59 // pred_check_branch
          %509 = sbr.rel (%p507) target = $region84
        $region83: #{_m2t2_forward.1} parent=59 // pred_region
          %vm510 = vcmask 7168
          %511 = vst.msk [vmem:[#allocation3] sm:$0xff] %vm510, -inf
          %512 = vst.msk [vmem:[#allocation4] sm:$0xff] %vm510, 0.0
          %513 = vst [vmem:[#allocation5] sm:$0xff] 0.0
        $region84: #{_m2t2_forward.1} parent=59 // pred_fallthru
          _
        %v514 = vld [vmem:[%s497] sm:$0xf]
        %v515 = vld [vmem:[%s497 + $0x4] sm:$0xf]
        %v516 = vld [vmem:[%s497 + $0x8] sm:$0xf]
        %v517 = vld [vmem:[%s497 + $0xc] sm:$0xf]
        %v518 = vld [vmem:[%s497 + $0x10] sm:$0xf]
        %v519 = vld [vmem:[%s497 + $0x14] sm:$0xf]
        %v520 = vld [vmem:[%s497 + $0x18] sm:$0xf]
        %v521 = vld [vmem:[%s497 + $0x1c] sm:$0xf]
        %v522 = vld [vmem:[%s497 + $0x20] sm:$0xf]
        %v523 = vld [vmem:[%s497 + $0x24] sm:$0xf]
        %v524 = vld [vmem:[%s497 + $0x28] sm:$0xf]
        %v525 = vld [vmem:[%s497 + $0x2c] sm:$0xf]
        %v526 = vld [vmem:[%s497 + $0x30] sm:$0xf]
        %v527 = vld [vmem:[%s497 + $0x34] sm:$0xf]
        %v528 = vld [vmem:[%s497 + $0x38] sm:$0xf]
        %v529 = vld [vmem:[%s497 + $0x3c] sm:$0xf]
        %v530 = vld [vmem:[%s1] sm:$0xf]
        %v531 = vld [vmem:[%s1 + $0x4] sm:$0xf]
        %v532 = vld [vmem:[%s1 + $0x8] sm:$0xf]
        %v533 = vld [vmem:[%s1 + $0xc] sm:$0xf]
        %v534 = vld [vmem:[%s1 + $0x10] sm:$0xf]
        %v535 = vld [vmem:[%s1 + $0x14] sm:$0xf]
        %v536 = vld [vmem:[%s1 + $0x18] sm:$0xf]
        %v537 = vld [vmem:[%s1 + $0x1c] sm:$0xf]
        %v538 = vperm.slane %v504, 0
        %v555 = vunpack.c.l.b16 %v514
        %v556 = vunpack.c.l.b16 %v515
        %v557 = vunpack.c.l.b16 %v516
        %v558 = vunpack.c.l.b16 %v517
        %v559 = vunpack.c.l.b16 %v518
        %v560 = vunpack.c.l.b16 %v519
        %v561 = vunpack.c.l.b16 %v520
        %v562 = vunpack.c.l.b16 %v521
        %v563 = vunpack.c.l.b16 %v522
        %v564 = vunpack.c.l.b16 %v523
        %v565 = vunpack.c.l.b16 %v524
        %v566 = vunpack.c.l.b16 %v525
        %v567 = vunpack.c.l.b16 %v526
        %v568 = vunpack.c.l.b16 %v527
        %v569 = vunpack.c.l.b16 %v528
        %v570 = vunpack.c.l.b16 %v529
        %v571 = vpack.c.b16 %v556, %v555
        %v572 = vpack.c.b16 %v558, %v557
        %v573 = vpack.c.b16 %v560, %v559
        %v574 = vpack.c.b16 %v562, %v561
        %v575 = vpack.c.b16 %v564, %v563
        %v576 = vpack.c.b16 %v566, %v565
        %v577 = vpack.c.b16 %v568, %v567
        %v578 = vpack.c.b16 %v570, %v569
        %v587 = vunpack.c.l.b16 %v530
        %v588 = vunpack.c.l.b16 %v531
        %v589 = vunpack.c.l.b16 %v532
        %v590 = vunpack.c.l.b16 %v533
        %v591 = vunpack.c.l.b16 %v534
        %v592 = vunpack.c.l.b16 %v535
        %v593 = vunpack.c.l.b16 %v536
        %v594 = vunpack.c.l.b16 %v537
        %v595 = vpack.c.b16 %v588, %v587
        %v596 = vpack.c.b16 %v590, %v589
        %v597 = vpack.c.b16 %v592, %v591
        %v598 = vpack.c.b16 %v594, %v593
        %vm603 = vcmask 523264
        %v605 = vsel %vm603, %v571, 0
        %v608 = vsel %vm603, %v572, 0
        %v611 = vsel %vm603, %v573, 0
        %v614 = vsel %vm603, %v574, 0
        %v617 = vsel %vm603, %v575, 0
        %v620 = vsel %vm603, %v576, 0
        %v623 = vsel %vm603, %v577, 0
        %v626 = vsel %vm603, %v578, 0
        %628 = vmatpush.bf16.msra.mxu0 0
        %629 = vmatpush.bf16.msra.mxu0 0
        %630 = vmatpush.bf16.msra.mxu0 0
        %631 = vmatpush.bf16.msra.mxu0 0
        %632 = vmatpush.bf16.msra.mxu0 %v598
        %633 = vmatpush.bf16.msra.mxu0 %v597
        %634 = vmatpush.bf16.msra.mxu0 %v596
        %635 = vmatpush.bf16.msra.mxu0 %v595
        %636 = vmatmul.bf16.gmra.mxu0 %v605
        %v637 = vpop.f32.mrf.mxu0
        %v638 = vadd.f32 %v538, %v637
        %v639 = vpop.f32.mrf.mxu0
        %v640 = vadd.f32 %v538, %v639
        %641 = vmatmul.bf16.gmra.mxu0 %v608
        %v642 = vpop.f32.mrf.mxu0
        %v643 = vadd.f32 %v538, %v642
        %v644 = vpop.f32.mrf.mxu0
        %v645 = vadd.f32 %v538, %v644
        %646 = vmatmul.bf16.gmra.mxu0 %v611
        %v647 = vpop.f32.mrf.mxu0
        %v648 = vadd.f32 %v538, %v647
        %v649 = vpop.f32.mrf.mxu0
        %v650 = vadd.f32 %v538, %v649
        %651 = vmatmul.bf16.gmra.mxu0 %v614
        %v652 = vpop.f32.mrf.mxu0
        %v653 = vadd.f32 %v538, %v652
        %v654 = vpop.f32.mrf.mxu0
        %v655 = vadd.f32 %v538, %v654
        %656 = vmatmul.bf16.gmra.mxu0 %v617
        %v657 = vpop.f32.mrf.mxu0
        %v658 = vadd.f32 %v538, %v657
        %v659 = vpop.f32.mrf.mxu0
        %v660 = vadd.f32 %v538, %v659
        %661 = vmatmul.bf16.gmra.mxu0 %v620
        %v662 = vpop.f32.mrf.mxu0
        %v663 = vadd.f32 %v538, %v662
        %v664 = vpop.f32.mrf.mxu0
        %v665 = vadd.f32 %v538, %v664
        %666 = vmatmul.bf16.gmra.mxu0 %v623
        %v667 = vpop.f32.mrf.mxu0
        %v668 = vadd.f32 %v538, %v667
        %v669 = vpop.f32.mrf.mxu0
        %v670 = vadd.f32 %v538, %v669
        %671 = vmatmul.bf16.gmra.mxu0 %v626
        %v672 = vpop.f32.mrf.mxu0
        %v673 = vadd.f32 %v538, %v672
        %v674 = vpop.f32.mrf.mxu0
        %v675 = vadd.f32 %v538, %v674
        %676 = vdwg.mxu0
        %v677 = vmax.f32 %v638, 0.0
        %v678 = vmax.f32 %v640, 0.0
        %v679 = vmax.f32 %v643, 0.0
        %v680 = vmax.f32 %v645, 0.0
        %v681 = vmax.f32 %v648, 0.0
        %v682 = vmax.f32 %v650, 0.0
        %v683 = vmax.f32 %v653, 0.0
        %v684 = vmax.f32 %v655, 0.0
        %v685 = vmax.f32 %v658, 0.0
        %v686 = vmax.f32 %v660, 0.0
        %v687 = vmax.f32 %v663, 0.0
        %v688 = vmax.f32 %v665, 0.0
        %v689 = vmax.f32 %v668, 0.0
        %v690 = vmax.f32 %v670, 0.0
        %v691 = vmax.f32 %v673, 0.0
        %v692 = vmax.f32 %v675, 0.0
        %v693 = vpack.c.bf16 %v677, %v677
        %v694 = vpack.c.bf16 %v678, %v678
        %v695 = vpack.c.bf16 %v679, %v679
        %v696 = vpack.c.bf16 %v680, %v680
        %v697 = vpack.c.bf16 %v681, %v681
        %v698 = vpack.c.bf16 %v682, %v682
        %v699 = vpack.c.bf16 %v683, %v683
        %v700 = vpack.c.bf16 %v684, %v684
        %v701 = vpack.c.bf16 %v685, %v685
        %v702 = vpack.c.bf16 %v686, %v686
        %v703 = vpack.c.bf16 %v687, %v687
        %v704 = vpack.c.bf16 %v688, %v688
        %v705 = vpack.c.bf16 %v689, %v689
        %v706 = vpack.c.bf16 %v690, %v690
        %v707 = vpack.c.bf16 %v691, %v691
        %v708 = vpack.c.bf16 %v692, %v692
        %s709 = smul.u32 %s34, 128
        %s710 = sshra.s32 %s709, 3
        %s711 = sand.u32 %s709, 7
        %s712 = smul.addr %s710, 4
        %s713 = scalar_lea.vmem [#allocation2], %s712
        %714 = vst [vmem:[%s713] sm:$0xf] %v693
        %715 = vst [vmem:[%s713 + $0x4] sm:$0xf] %v694
        %716 = vst [vmem:[%s713 + $0x8] sm:$0xf] %v695
        %717 = vst [vmem:[%s713 + $0xc] sm:$0xf] %v696
        %718 = vst [vmem:[%s713 + $0x10] sm:$0xf] %v697
        %719 = vst [vmem:[%s713 + $0x14] sm:$0xf] %v698
        %720 = vst [vmem:[%s713 + $0x18] sm:$0xf] %v699
        %721 = vst [vmem:[%s713 + $0x1c] sm:$0xf] %v700
        %722 = vst [vmem:[%s713 + $0x20] sm:$0xf] %v701
        %723 = vst [vmem:[%s713 + $0x24] sm:$0xf] %v702
        %724 = vst [vmem:[%s713 + $0x28] sm:$0xf] %v703
        %725 = vst [vmem:[%s713 + $0x2c] sm:$0xf] %v704
        %726 = vst [vmem:[%s713 + $0x30] sm:$0xf] %v705
        %727 = vst [vmem:[%s713 + $0x34] sm:$0xf] %v706
        %728 = vst [vmem:[%s713 + $0x38] sm:$0xf] %v707
        %729 = vst [vmem:[%s713 + $0x3c] sm:$0xf] %v708
        %v730 = vld [vmem:[%s4] sm:$0xff]
        %v731 = vld [vmem:[%s4 + $0x8] sm:$0xff]
        %v732 = vld [vmem:[%s4 + $0x10] sm:$0xff]
        %v733 = vld [vmem:[%s4 + $0x18] sm:$0xff]
        %v734 = vld [vmem:[%s4 + $0x20] sm:$0xff]
        %v735 = vld [vmem:[%s4 + $0x28] sm:$0xff]
        %v736 = vld [vmem:[%s4 + $0x30] sm:$0xff]
        %v737 = vld [vmem:[%s4 + $0x38] sm:$0xff]
        %v738 = vld [vmem:[%s4 + $0x40] sm:$0xff]
        %v739 = vld [vmem:[%s4 + $0x48] sm:$0xff]
        %v740 = vld [vmem:[%s4 + $0x50] sm:$0xff]
        %v741 = vld [vmem:[%s4 + $0x58] sm:$0xff]
        %v742 = vld [vmem:[%s4 + $0x60] sm:$0xff]
        %v743 = vld [vmem:[%s4 + $0x68] sm:$0xff]
        %v744 = vld [vmem:[%s4 + $0x70] sm:$0xff]
        %v745 = vld [vmem:[%s4 + $0x78] sm:$0xff]
        %v762 = vunpack.c.l.b16 %v693
        %v763 = vunpack.c.l.b16 %v694
        %v764 = vunpack.c.l.b16 %v695
        %v765 = vunpack.c.l.b16 %v696
        %v766 = vunpack.c.l.b16 %v697
        %v767 = vunpack.c.l.b16 %v698
        %v768 = vunpack.c.l.b16 %v699
        %v769 = vunpack.c.l.b16 %v700
        %v770 = vunpack.c.l.b16 %v701
        %v771 = vunpack.c.l.b16 %v702
        %v772 = vunpack.c.l.b16 %v703
        %v773 = vunpack.c.l.b16 %v704
        %v774 = vunpack.c.l.b16 %v705
        %v775 = vunpack.c.l.b16 %v706
        %v776 = vunpack.c.l.b16 %v707
        %v777 = vunpack.c.l.b16 %v708
        %v778 = vpack.c.b16 %v763, %v762
        %v779 = vpack.c.b16 %v765, %v764
        %v780 = vpack.c.b16 %v767, %v766
        %v781 = vpack.c.b16 %v769, %v768
        %v782 = vpack.c.b16 %v771, %v770
        %v783 = vpack.c.b16 %v773, %v772
        %v784 = vpack.c.b16 %v775, %v774
        %v785 = vpack.c.b16 %v777, %v776
        %v810 = vunpack.c.l.b16 %v730
        %v811 = vunpack.c.h.b16 %v730
        %v812 = vunpack.c.l.b16 %v731
        %v813 = vunpack.c.h.b16 %v731
        %v814 = vunpack.c.l.b16 %v732
        %v815 = vunpack.c.h.b16 %v732
        %v816 = vunpack.c.l.b16 %v733
        %v817 = vunpack.c.h.b16 %v733
        %v818 = vunpack.c.l.b16 %v734
        %v819 = vunpack.c.h.b16 %v734
        %v820 = vunpack.c.l.b16 %v735
        %v821 = vunpack.c.h.b16 %v735
        %v822 = vunpack.c.l.b16 %v736
        %v823 = vunpack.c.h.b16 %v736
        %v824 = vunpack.c.l.b16 %v737
        %v825 = vunpack.c.h.b16 %v737
        %v826 = vunpack.c.l.b16 %v738
        %v827 = vunpack.c.h.b16 %v738
        %v828 = vunpack.c.l.b16 %v739
        %v829 = vunpack.c.h.b16 %v739
        %v830 = vunpack.c.l.b16 %v740
        %v831 = vunpack.c.h.b16 %v740
        %v832 = vunpack.c.l.b16 %v741
        %v833 = vunpack.c.h.b16 %v741
        %v834 = vunpack.c.l.b16 %v742
        %v835 = vunpack.c.h.b16 %v742
        %v836 = vunpack.c.l.b16 %v743
        %v837 = vunpack.c.h.b16 %v743
        %v838 = vunpack.c.l.b16 %v744
        %v839 = vunpack.c.h.b16 %v744
        %v840 = vunpack.c.l.b16 %v745
        %v841 = vunpack.c.h.b16 %v745
        %v842 = vpack.c.b16 %v812, %v810
        %v843 = vpack.c.b16 %v813, %v811
        %v844 = vpack.c.b16 %v816, %v814
        %v845 = vpack.c.b16 %v817, %v815
        %v846 = vpack.c.b16 %v820, %v818
        %v847 = vpack.c.b16 %v821, %v819
        %v848 = vpack.c.b16 %v824, %v822
        %v849 = vpack.c.b16 %v825, %v823
        %v850 = vpack.c.b16 %v828, %v826
        %v851 = vpack.c.b16 %v829, %v827
        %v852 = vpack.c.b16 %v832, %v830
        %v853 = vpack.c.b16 %v833, %v831
        %v854 = vpack.c.b16 %v836, %v834
        %v855 = vpack.c.b16 %v837, %v835
        %v856 = vpack.c.b16 %v840, %v838
        %v857 = vpack.c.b16 %v841, %v839
        %874 = vmatpush.bf16.msra.mxu0 %v856
        %875 = vmatpush.bf16.msra.mxu0 %v854
        %876 = vmatpush.bf16.msra.mxu0 %v852
        %877 = vmatpush.bf16.msra.mxu0 %v850
        %878 = vmatpush.bf16.msra.mxu0 %v848
        %879 = vmatpush.bf16.msra.mxu0 %v846
        %880 = vmatpush.bf16.msra.mxu0 %v844
        %881 = vmatpush.bf16.msra.mxu0 %v842
        %882 = vmatmul.bf16.gmra.mxu0 %v778
        %v883 = vpop.f32.mrf.mxu0
        %v884 = vadd.f32 0.0, %v883
        %v885 = vpop.f32.mrf.mxu0
        %v886 = vadd.f32 0.0, %v885
        %887 = vmatmul.bf16.gmra.mxu0 %v779
        %v888 = vpop.f32.mrf.mxu0
        %v889 = vadd.f32 0.0, %v888
        %v890 = vpop.f32.mrf.mxu0
        %v891 = vadd.f32 0.0, %v890
        %892 = vmatmul.bf16.gmra.mxu0 %v780
        %v893 = vpop.f32.mrf.mxu0
        %v894 = vadd.f32 0.0, %v893
        %v895 = vpop.f32.mrf.mxu0
        %v896 = vadd.f32 0.0, %v895
        %897 = vmatmul.bf16.gmra.mxu0 %v781
        %v898 = vpop.f32.mrf.mxu0
        %v899 = vadd.f32 0.0, %v898
        %v900 = vpop.f32.mrf.mxu0
        %v901 = vadd.f32 0.0, %v900
        %902 = vmatmul.bf16.gmra.mxu0 %v782
        %v903 = vpop.f32.mrf.mxu0
        %v904 = vadd.f32 0.0, %v903
        %v905 = vpop.f32.mrf.mxu0
        %v906 = vadd.f32 0.0, %v905
        %907 = vmatmul.bf16.gmra.mxu0 %v783
        %v908 = vpop.f32.mrf.mxu0
        %v909 = vadd.f32 0.0, %v908
        %v910 = vpop.f32.mrf.mxu0
        %v911 = vadd.f32 0.0, %v910
        %912 = vmatmul.bf16.gmra.mxu0 %v784
        %v913 = vpop.f32.mrf.mxu0
        %v914 = vadd.f32 0.0, %v913
        %v915 = vpop.f32.mrf.mxu0
        %v916 = vadd.f32 0.0, %v915
        %917 = vmatmul.bf16.gmra.mxu0 %v785
        %v918 = vpop.f32.mrf.mxu0
        %v919 = vadd.f32 0.0, %v918
        %v920 = vpop.f32.mrf.mxu0
        %v921 = vadd.f32 0.0, %v920
        %922 = vdwg.mxu0
        %923 = vmatpush.bf16.msra.mxu0 %v857
        %924 = vmatpush.bf16.msra.mxu0 %v855
        %925 = vmatpush.bf16.msra.mxu0 %v853
        %926 = vmatpush.bf16.msra.mxu0 %v851
        %927 = vmatpush.bf16.msra.mxu0 %v849
        %928 = vmatpush.bf16.msra.mxu0 %v847
        %929 = vmatpush.bf16.msra.mxu0 %v845
        %930 = vmatpush.bf16.msra.mxu0 %v843
        %931 = vmatmul.bf16.gmra.mxu0 %v778
        %v932 = vpop.f32.mrf.mxu0
        %v933 = vadd.f32 0.0, %v932
        %v934 = vpop.f32.mrf.mxu0
        %v935 = vadd.f32 0.0, %v934
        %936 = vmatmul.bf16.gmra.mxu0 %v779
        %v937 = vpop.f32.mrf.mxu0
        %v938 = vadd.f32 0.0, %v937
        %v939 = vpop.f32.mrf.mxu0
        %v940 = vadd.f32 0.0, %v939
        %941 = vmatmul.bf16.gmra.mxu0 %v780
        %v942 = vpop.f32.mrf.mxu0
        %v943 = vadd.f32 0.0, %v942
        %v944 = vpop.f32.mrf.mxu0
        %v945 = vadd.f32 0.0, %v944
        %946 = vmatmul.bf16.gmra.mxu0 %v781
        %v947 = vpop.f32.mrf.mxu0
        %v948 = vadd.f32 0.0, %v947
        %v949 = vpop.f32.mrf.mxu0
        %v950 = vadd.f32 0.0, %v949
        %951 = vmatmul.bf16.gmra.mxu0 %v782
        %v952 = vpop.f32.mrf.mxu0
        %v953 = vadd.f32 0.0, %v952
        %v954 = vpop.f32.mrf.mxu0
        %v955 = vadd.f32 0.0, %v954
        %956 = vmatmul.bf16.gmra.mxu0 %v783
        %v957 = vpop.f32.mrf.mxu0
        %v958 = vadd.f32 0.0, %v957
        %v959 = vpop.f32.mrf.mxu0
        %v960 = vadd.f32 0.0, %v959
        %961 = vmatmul.bf16.gmra.mxu0 %v784
        %v962 = vpop.f32.mrf.mxu0
        %v963 = vadd.f32 0.0, %v962
        %v964 = vpop.f32.mrf.mxu0
        %v965 = vadd.f32 0.0, %v964
        %966 = vmatmul.bf16.gmra.mxu0 %v785
        %v967 = vpop.f32.mrf.mxu0
        %v968 = vadd.f32 0.0, %v967
        %v969 = vpop.f32.mrf.mxu0
        %v970 = vadd.f32 0.0, %v969
        %971 = vdwg.mxu0
        %v972 = vpack.c.bf16 %v933, %v884
        %v973 = vpack.c.bf16 %v935, %v886
        %v974 = vpack.c.bf16 %v938, %v889
        %v975 = vpack.c.bf16 %v940, %v891
        %v976 = vpack.c.bf16 %v943, %v894
        %v977 = vpack.c.bf16 %v945, %v896
        %v978 = vpack.c.bf16 %v948, %v899
        %v979 = vpack.c.bf16 %v950, %v901
        %v980 = vpack.c.bf16 %v953, %v904
        %v981 = vpack.c.bf16 %v955, %v906
        %v982 = vpack.c.bf16 %v958, %v909
        %v983 = vpack.c.bf16 %v960, %v911
        %v984 = vpack.c.bf16 %v963, %v914
        %v985 = vpack.c.bf16 %v965, %v916
        %v986 = vpack.c.bf16 %v968, %v919
        %v987 = vpack.c.bf16 %v970, %v921
        %v988 = vld [vmem:[%s3] sm:$0xf]
        %v1005 = vunpack.c.l.b16 %v972
        %v1006 = vunpack.c.l.b16 %v973
        %v1007 = vunpack.c.l.b16 %v974
        %v1008 = vunpack.c.l.b16 %v975
        %v1009 = vunpack.c.l.b16 %v976
        %v1010 = vunpack.c.l.b16 %v977
        %v1011 = vunpack.c.l.b16 %v978
        %v1012 = vunpack.c.l.b16 %v979
        %v1013 = vunpack.c.l.b16 %v980
        %v1014 = vunpack.c.l.b16 %v981
        %v1015 = vunpack.c.l.b16 %v982
        %v1016 = vunpack.c.l.b16 %v983
        %v1017 = vunpack.c.l.b16 %v984
        %v1018 = vunpack.c.l.b16 %v985
        %v1019 = vunpack.c.l.b16 %v986
        %v1020 = vunpack.c.l.b16 %v987
        %v1021 = vpack.c.b16 %v1006, %v1005
        %v1022 = vpack.c.b16 %v1008, %v1007
        %v1023 = vpack.c.b16 %v1010, %v1009
        %v1024 = vpack.c.b16 %v1012, %v1011
        %v1025 = vpack.c.b16 %v1014, %v1013
        %v1026 = vpack.c.b16 %v1016, %v1015
        %v1027 = vpack.c.b16 %v1018, %v1017
        %v1028 = vpack.c.b16 %v1020, %v1019
        %1037 = vmatpush.bf16.xpose.msra.mxu0 %v1028
        %1038 = vmatpush.bf16.xpose.msra.mxu0 %v1027
        %1039 = vmatpush.bf16.xpose.msra.mxu0 %v1026
        %1040 = vmatpush.bf16.xpose.msra.mxu0 %v1025
        %1041 = vmatpush.bf16.xpose.msra.mxu0 %v1024
        %1042 = vmatpush.bf16.xpose.msra.mxu0 %v1023
        %1043 = vmatpush.bf16.xpose.msra.mxu0 %v1022
        %1044 = vmatpush.bf16.xpose.msra.mxu0 %v1021
        %1045 = vmatmul.bf16.gmra.mxu0 %v988
        %v1046 = vpop.f32.mrf.mxu0
        %v1047 = vadd.f32 0.0, %v1046
        %v1048 = vpop.f32.mrf.mxu0
        %1049 = vdwg.mxu0
        %v1050 = vld [vmem:[#allocation3] sm:$0xff]
        %1051 = vmax.xlane.f32.xlu0 %v1047
        %v1052 = vpop.xlane.xlu0 %1051
        %v1053 = vmax.f32 %v1050, %v1052
        %v1054 = vsub.f32 %v1050, %v1053
        %v1055 = vmul.f32 %v1054, 1.442695
        %v1056 = vpow.pop %v1055
        %1058 = vset.pattern.permute.xlu0 0
        %1059 = vperm.xlu0 %1058, %v1053
        %v1060 = vpop.permute.xlu0 %1059
        %v1062 = vsub.f32 %v1047, %v1060
        %v1063 = vmul.f32 %v1062, 1.442695
        %v1064 = vpow.pop %v1063
        %v1065 = vld [vmem:[#allocation4] sm:$0xff]
        %v1066 = vmul.f32 %v1056, %v1065
        %1067 = vadd.xlane.f32.xlu0 %v1064
        %v1068 = vpop.xlane.xlu0 %1067
        %v1069 = vadd.f32 %v1066, %v1068
        %vm1070 = vcmask 7168
        %1071 = vst.msk [vmem:[#allocation4] sm:$0xff] %vm1070, %v1069
        %v1072 = vld [vmem:[#allocation5] sm:$0xff]
        %1074 = vset.pattern.permute.xlu0 0
        %1075 = vperm.xlu0 %1074, %v1056
        %v1076 = vpop.permute.xlu0 %1075
        %v1078 = vmul.f32 %v1076, %v1072
        %v1079 = vpack.c.bf16 %v1064, %v1064
        %v1080 = vunpack.c.h.b16 %v972
        %v1081 = vunpack.c.h.b16 %v973
        %v1082 = vunpack.c.h.b16 %v974
        %v1083 = vunpack.c.h.b16 %v975
        %v1084 = vunpack.c.h.b16 %v976
        %v1085 = vunpack.c.h.b16 %v977
        %v1086 = vunpack.c.h.b16 %v978
        %v1087 = vunpack.c.h.b16 %v979
        %v1088 = vunpack.c.h.b16 %v980
        %v1089 = vunpack.c.h.b16 %v981
        %v1090 = vunpack.c.h.b16 %v982
        %v1091 = vunpack.c.h.b16 %v983
        %v1092 = vunpack.c.h.b16 %v984
        %v1093 = vunpack.c.h.b16 %v985
        %v1094 = vunpack.c.h.b16 %v986
        %v1095 = vunpack.c.h.b16 %v987
        %v1096 = vpack.c.b16 %v1081, %v1080
        %v1097 = vpack.c.b16 %v1083, %v1082
        %v1098 = vpack.c.b16 %v1085, %v1084
        %v1099 = vpack.c.b16 %v1087, %v1086
        %v1100 = vpack.c.b16 %v1089, %v1088
        %v1101 = vpack.c.b16 %v1091, %v1090
        %v1102 = vpack.c.b16 %v1093, %v1092
        %v1103 = vpack.c.b16 %v1095, %v1094
        %1112 = vmatpush.bf16.msra.mxu0 %v1103
        %1113 = vmatpush.bf16.msra.mxu0 %v1102
        %1114 = vmatpush.bf16.msra.mxu0 %v1101
        %1115 = vmatpush.bf16.msra.mxu0 %v1100
        %1116 = vmatpush.bf16.msra.mxu0 %v1099
        %1117 = vmatpush.bf16.msra.mxu0 %v1098
        %1118 = vmatpush.bf16.msra.mxu0 %v1097
        %1119 = vmatpush.bf16.msra.mxu0 %v1096
        %1120 = vmatmul.bf16.gmra.mxu0 %v1079
        %v1121 = vpop.f32.mrf.mxu0
        %v1122 = vadd.f32 0.0, %v1121
        %v1123 = vpop.f32.mrf.mxu0
        %1124 = vdwg.mxu0
        %v1125 = vadd.f32 %v1078, %v1122
        %1126 = vst [vmem:[#allocation5] sm:$0xff] %v1125
        %1127 = vst.msk [vmem:[#allocation3] sm:$0xff] %vm1070, %v1053
        %p1128 = scmp.eq.s32.totalorder %s34, 1
        // Predicated region
        $region85: #{_m2t2_forward.1} parent=59 // pred_check
          %p1129 = pneg %p1128
        $region86: #{_m2t2_forward.1} parent=59 // pred_check_branch
          %1131 = sbr.rel (%p1129) target = $region88
        $region87: #{_m2t2_forward.1} parent=59 // pred_region
          %v1132 = vld [vmem:[#allocation5] sm:$0xff]
          %v1133 = vld [vmem:[#allocation4] sm:$0xff]
          %v1134 = vrcp.pop %v1133
          %1136 = vset.pattern.permute.xlu0 0
          %1137 = vperm.xlu0 %1136, %v1134
          %v1138 = vpop.permute.xlu0 %1137
          %v1140 = vmul.f32 %v1132, %v1138
          %v1141 = vld [vmem:[#allocation6] sm:$0xff]
          %v1142 = vpack.c.bf16 %v1140, %v1140
          %v1143 = vld [vmem:[#allocation9] sm:$0xf]
          %v1144 = vld [vmem:[#allocation9 + $0x4] sm:$0xf]
          %v1145 = vld [vmem:[#allocation9 + $0x8] sm:$0xf]
          %v1146 = vld [vmem:[#allocation9 + $0xc] sm:$0xf]
          %v1147 = vld [vmem:[#allocation9 + $0x10] sm:$0xf]
          %v1148 = vld [vmem:[#allocation9 + $0x14] sm:$0xf]
          %v1149 = vld [vmem:[#allocation9 + $0x18] sm:$0xf]
          %v1150 = vld [vmem:[#allocation9 + $0x1c] sm:$0xf]
          %v1151 = vld [vmem:[#allocation9 + $0x20] sm:$0xf]
          %v1152 = vld [vmem:[#allocation9 + $0x24] sm:$0xf]
          %v1153 = vld [vmem:[#allocation9 + $0x28] sm:$0xf]
          %v1154 = vld [vmem:[#allocation9 + $0x2c] sm:$0xf]
          %v1155 = vld [vmem:[#allocation9 + $0x30] sm:$0xf]
          %v1156 = vld [vmem:[#allocation9 + $0x34] sm:$0xf]
          %v1157 = vld [vmem:[#allocation9 + $0x38] sm:$0xf]
          %v1158 = vld [vmem:[#allocation9 + $0x3c] sm:$0xf]
          %v1175 = vunpack.c.l.b16 %v1143
          %v1176 = vunpack.c.l.b16 %v1144
          %v1177 = vunpack.c.l.b16 %v1145
          %v1178 = vunpack.c.l.b16 %v1146
          %v1179 = vunpack.c.l.b16 %v1147
          %v1180 = vunpack.c.l.b16 %v1148
          %v1181 = vunpack.c.l.b16 %v1149
          %v1182 = vunpack.c.l.b16 %v1150
          %v1183 = vunpack.c.l.b16 %v1151
          %v1184 = vunpack.c.l.b16 %v1152
          %v1185 = vunpack.c.l.b16 %v1153
          %v1186 = vunpack.c.l.b16 %v1154
          %v1187 = vunpack.c.l.b16 %v1155
          %v1188 = vunpack.c.l.b16 %v1156
          %v1189 = vunpack.c.l.b16 %v1157
          %v1190 = vunpack.c.l.b16 %v1158
          %v1191 = vpack.c.b16 %v1176, %v1175
          %v1192 = vpack.c.b16 %v1178, %v1177
          %v1193 = vpack.c.b16 %v1180, %v1179
          %v1194 = vpack.c.b16 %v1182, %v1181
          %v1195 = vpack.c.b16 %v1184, %v1183
          %v1196 = vpack.c.b16 %v1186, %v1185
          %v1197 = vpack.c.b16 %v1188, %v1187
          %v1198 = vpack.c.b16 %v1190, %v1189
          %1207 = vmatpush.bf16.msra.mxu0 %v1198
          %1208 = vmatpush.bf16.msra.mxu0 %v1197
          %1209 = vmatpush.bf16.msra.mxu0 %v1196
          %1210 = vmatpush.bf16.msra.mxu0 %v1195
          %1211 = vmatpush.bf16.msra.mxu0 %v1194
          %1212 = vmatpush.bf16.msra.mxu0 %v1193
          %1213 = vmatpush.bf16.msra.mxu0 %v1192
          %1214 = vmatpush.bf16.msra.mxu0 %v1191
          %1215 = vmatmul.bf16.gmra.mxu0 %v1142
          %v1216 = vpop.f32.mrf.mxu0
          %v1217 = vadd.f32 0.0, %v1216
          %v1218 = vpop.f32.mrf.mxu0
          %1219 = vdwg.mxu0
          %v1220 = vadd.f32 %v1141, %v1217
          %1221 = vadd.xlane.f32.xlu0 %v1220
          %v1222 = vpop.xlane.xlu0 %1221
          %v1223 = vrcp.pop 128.0
          %v1224 = vmul.f32 128.0, %v1223
          %v1225 = vsub.f32 1.0, %v1224
          %v1226 = vmul.f32 %v1223, %v1225
          %v1227 = vadd.f32 %v1223, %v1226
          %vm1228 = vweird.f32 %v1223
          %v1229 = vsel %vm1228, %v1223, %v1227
          %v1230 = vmul.f32 %v1222, %v1229
          %v1231 = vsub.f32 %v1220, %v1230
          %v1232 = vmul.f32 %v1231, %v1231
          %1233 = vadd.xlane.f32.xlu0 %v1232
          %v1234 = vpop.xlane.xlu0 %1233
          %v1235 = vmul.f32 %v1234, %v1229
          %v1236 = vadd.f32 %v1235, 1e-05
          %v1237 = vrsqrt.pop %v1236
          %v1238 = vmul.f32 %v1237, %v1236
          %v1239 = vmul.f32 %v1238, %v1237
          %v1240 = vmul.f32 0.5, %v1239
          %v1241 = vsub.f32 1.5, %v1240
          %v1242 = vmul.f32 %v1237, %v1241
          %vm1243 = vweird.f32 %v1236
          %vm1244 = vweird.f32 %v1237
          %vm1245 = vmor %vm1243, %vm1244
          %v1246 = vsel %vm1245, %v1237, %v1242
          %v1247 = vmul.f32 %v1231, %v1246
          %v1248 = vperm.slane %v504, 3
          %v1249 = vmul.f32 %v1247, %v1248
          %v1250 = vperm.slane %v504, 4
          %v1251 = vadd.f32 %v1249, %v1250
          %v1252 = vpack.c.bf16 %v1251, %v1251
          %v1253 = vld [vmem:[%s6] sm:$0xff]
          %v1254 = vld [vmem:[%s6 + $0x8] sm:$0xff]
          %v1255 = vld [vmem:[%s6 + $0x10] sm:$0xff]
          %v1256 = vld [vmem:[%s6 + $0x18] sm:$0xff]
          %v1257 = vld [vmem:[%s6 + $0x20] sm:$0xff]
          %v1258 = vld [vmem:[%s6 + $0x28] sm:$0xff]
          %v1259 = vld [vmem:[%s6 + $0x30] sm:$0xff]
          %v1260 = vld [vmem:[%s6 + $0x38] sm:$0xff]
          %v1261 = vld [vmem:[%s6 + $0x40] sm:$0xff]
          %v1262 = vld [vmem:[%s6 + $0x48] sm:$0xff]
          %v1263 = vld [vmem:[%s6 + $0x50] sm:$0xff]
          %v1264 = vld [vmem:[%s6 + $0x58] sm:$0xff]
          %v1265 = vld [vmem:[%s6 + $0x60] sm:$0xff]
          %v1266 = vld [vmem:[%s6 + $0x68] sm:$0xff]
          %v1267 = vld [vmem:[%s6 + $0x70] sm:$0xff]
          %v1268 = vld [vmem:[%s6 + $0x78] sm:$0xff]
          %v1269 = vperm.slane %v504, 1
          %v1270 = vperm.slane %v505, 1
          %v1287 = vunpack.c.l.b16 %v1253
          %v1288 = vunpack.c.h.b16 %v1253
          %v1289 = vunpack.c.l.b16 %v1254
          %v1290 = vunpack.c.h.b16 %v1254
          %v1291 = vunpack.c.l.b16 %v1255
          %v1292 = vunpack.c.h.b16 %v1255
          %v1293 = vunpack.c.l.b16 %v1256
          %v1294 = vunpack.c.h.b16 %v1256
          %v1295 = vunpack.c.l.b16 %v1257
          %v1296 = vunpack.c.h.b16 %v1257
          %v1297 = vunpack.c.l.b16 %v1258
          %v1298 = vunpack.c.h.b16 %v1258
          %v1299 = vunpack.c.l.b16 %v1259
          %v1300 = vunpack.c.h.b16 %v1259
          %v1301 = vunpack.c.l.b16 %v1260
          %v1302 = vunpack.c.h.b16 %v1260
          %v1303 = vunpack.c.l.b16 %v1261
          %v1304 = vunpack.c.h.b16 %v1261
          %v1305 = vunpack.c.l.b16 %v1262
          %v1306 = vunpack.c.h.b16 %v1262
          %v1307 = vunpack.c.l.b16 %v1263
          %v1308 = vunpack.c.h.b16 %v1263
          %v1309 = vunpack.c.l.b16 %v1264
          %v1310 = vunpack.c.h.b16 %v1264
          %v1311 = vunpack.c.l.b16 %v1265
          %v1312 = vunpack.c.h.b16 %v1265
          %v1313 = vunpack.c.l.b16 %v1266
          %v1314 = vunpack.c.h.b16 %v1266
          %v1315 = vunpack.c.l.b16 %v1267
          %v1316 = vunpack.c.h.b16 %v1267
          %v1317 = vunpack.c.l.b16 %v1268
          %v1318 = vunpack.c.h.b16 %v1268
          %v1319 = vpack.c.b16 %v1289, %v1287
          %v1320 = vpack.c.b16 %v1290, %v1288
          %v1321 = vpack.c.b16 %v1293, %v1291
          %v1322 = vpack.c.b16 %v1294, %v1292
          %v1323 = vpack.c.b16 %v1297, %v1295
          %v1324 = vpack.c.b16 %v1298, %v1296
          %v1325 = vpack.c.b16 %v1301, %v1299
          %v1326 = vpack.c.b16 %v1302, %v1300
          %v1327 = vpack.c.b16 %v1305, %v1303
          %v1328 = vpack.c.b16 %v1306, %v1304
          %v1329 = vpack.c.b16 %v1309, %v1307
          %v1330 = vpack.c.b16 %v1310, %v1308
          %v1331 = vpack.c.b16 %v1313, %v1311
          %v1332 = vpack.c.b16 %v1314, %v1312
          %v1333 = vpack.c.b16 %v1317, %v1315
          %v1334 = vpack.c.b16 %v1318, %v1316
          %1351 = vmatpush.bf16.msra.mxu0 %v1333
          %1352 = vmatpush.bf16.msra.mxu0 %v1331
          %1353 = vmatpush.bf16.msra.mxu0 %v1329
          %1354 = vmatpush.bf16.msra.mxu0 %v1327
          %1355 = vmatpush.bf16.msra.mxu0 %v1325
          %1356 = vmatpush.bf16.msra.mxu0 %v1323
          %1357 = vmatpush.bf16.msra.mxu0 %v1321
          %1358 = vmatpush.bf16.msra.mxu0 %v1319
          %1359 = vmatmul.bf16.gmra.mxu0 %v1252
          %v1360 = vpop.f32.mrf.mxu0
          %v1361 = vadd.f32 %v1269, %v1360
          %v1362 = vpop.f32.mrf.mxu0
          %1363 = vdwg.mxu0
          %1364 = vmatpush.bf16.msra.mxu0 %v1334
          %1365 = vmatpush.bf16.msra.mxu0 %v1332
          %1366 = vmatpush.bf16.msra.mxu0 %v1330
          %1367 = vmatpush.bf16.msra.mxu0 %v1328
          %1368 = vmatpush.bf16.msra.mxu0 %v1326
          %1369 = vmatpush.bf16.msra.mxu0 %v1324
          %1370 = vmatpush.bf16.msra.mxu0 %v1322
          %1371 = vmatpush.bf16.msra.mxu0 %v1320
          %1372 = vmatmul.bf16.gmra.mxu0 %v1252
          %v1373 = vpop.f32.mrf.mxu0
          %v1374 = vadd.f32 %v1270, %v1373
          %v1375 = vpop.f32.mrf.mxu0
          %1376 = vdwg.mxu0
          %v1377 = vmax.f32 %v1361, 0.0
          %v1378 = vmax.f32 %v1374, 0.0
          %v1379 = vpack.c.bf16 %v1377, %v1377
          %v1380 = vpack.c.bf16 %v1378, %v1378
          %v1381 = vld [vmem:[#allocation11] sm:$0xf]
          %v1382 = vld [vmem:[#allocation11 + $0x4] sm:$0xf]
          %v1383 = vld [vmem:[#allocation11 + $0x8] sm:$0xf]
          %v1384 = vld [vmem:[#allocation11 + $0xc] sm:$0xf]
          %v1385 = vld [vmem:[#allocation11 + $0x10] sm:$0xf]
          %v1386 = vld [vmem:[#allocation11 + $0x14] sm:$0xf]
          %v1387 = vld [vmem:[#allocation11 + $0x18] sm:$0xf]
          %v1388 = vld [vmem:[#allocation11 + $0x1c] sm:$0xf]
          %v1389 = vld [vmem:[#allocation11 + $0x20] sm:$0xf]
          %v1390 = vld [vmem:[#allocation11 + $0x24] sm:$0xf]
          %v1391 = vld [vmem:[#allocation11 + $0x28] sm:$0xf]
          %v1392 = vld [vmem:[#allocation11 + $0x2c] sm:$0xf]
          %v1393 = vld [vmem:[#allocation11 + $0x30] sm:$0xf]
          %v1394 = vld [vmem:[#allocation11 + $0x34] sm:$0xf]
          %v1395 = vld [vmem:[#allocation11 + $0x38] sm:$0xf]
          %v1396 = vld [vmem:[#allocation11 + $0x3c] sm:$0xf]
          %v1397 = vld [vmem:[#allocation11 + $0x40] sm:$0xf]
          %v1398 = vld [vmem:[#allocation11 + $0x44] sm:$0xf]
          %v1399 = vld [vmem:[#allocation11 + $0x48] sm:$0xf]
          %v1400 = vld [vmem:[#allocation11 + $0x4c] sm:$0xf]
          %v1401 = vld [vmem:[#allocation11 + $0x50] sm:$0xf]
          %v1402 = vld [vmem:[#allocation11 + $0x54] sm:$0xf]
          %v1403 = vld [vmem:[#allocation11 + $0x58] sm:$0xf]
          %v1404 = vld [vmem:[#allocation11 + $0x5c] sm:$0xf]
          %v1405 = vld [vmem:[#allocation11 + $0x60] sm:$0xf]
          %v1406 = vld [vmem:[#allocation11 + $0x64] sm:$0xf]
          %v1407 = vld [vmem:[#allocation11 + $0x68] sm:$0xf]
          %v1408 = vld [vmem:[#allocation11 + $0x6c] sm:$0xf]
          %v1409 = vld [vmem:[#allocation11 + $0x70] sm:$0xf]
          %v1410 = vld [vmem:[#allocation11 + $0x74] sm:$0xf]
          %v1411 = vld [vmem:[#allocation11 + $0x78] sm:$0xf]
          %v1412 = vld [vmem:[#allocation11 + $0x7c] sm:$0xf]
          %v1445 = vunpack.c.l.b16 %v1381
          %v1446 = vunpack.c.l.b16 %v1382
          %v1447 = vunpack.c.l.b16 %v1383
          %v1448 = vunpack.c.l.b16 %v1384
          %v1449 = vunpack.c.l.b16 %v1385
          %v1450 = vunpack.c.l.b16 %v1386
          %v1451 = vunpack.c.l.b16 %v1387
          %v1452 = vunpack.c.l.b16 %v1388
          %v1453 = vunpack.c.l.b16 %v1389
          %v1454 = vunpack.c.l.b16 %v1390
          %v1455 = vunpack.c.l.b16 %v1391
          %v1456 = vunpack.c.l.b16 %v1392
          %v1457 = vunpack.c.l.b16 %v1393
          %v1458 = vunpack.c.l.b16 %v1394
          %v1459 = vunpack.c.l.b16 %v1395
          %v1460 = vunpack.c.l.b16 %v1396
          %v1461 = vunpack.c.l.b16 %v1397
          %v1462 = vunpack.c.l.b16 %v1398
          %v1463 = vunpack.c.l.b16 %v1399
          %v1464 = vunpack.c.l.b16 %v1400
          %v1465 = vunpack.c.l.b16 %v1401
          %v1466 = vunpack.c.l.b16 %v1402
          %v1467 = vunpack.c.l.b16 %v1403
          %v1468 = vunpack.c.l.b16 %v1404
          %v1469 = vunpack.c.l.b16 %v1405
          %v1470 = vunpack.c.l.b16 %v1406
          %v1471 = vunpack.c.l.b16 %v1407
          %v1472 = vunpack.c.l.b16 %v1408
          %v1473 = vunpack.c.l.b16 %v1409
          %v1474 = vunpack.c.l.b16 %v1410
          %v1475 = vunpack.c.l.b16 %v1411
          %v1476 = vunpack.c.l.b16 %v1412
          %v1477 = vpack.c.b16 %v1446, %v1445
          %v1478 = vpack.c.b16 %v1448, %v1447
          %v1479 = vpack.c.b16 %v1450, %v1449
          %v1480 = vpack.c.b16 %v1452, %v1451
          %v1481 = vpack.c.b16 %v1454, %v1453
          %v1482 = vpack.c.b16 %v1456, %v1455
          %v1483 = vpack.c.b16 %v1458, %v1457
          %v1484 = vpack.c.b16 %v1460, %v1459
          %v1485 = vpack.c.b16 %v1462, %v1461
          %v1486 = vpack.c.b16 %v1464, %v1463
          %v1487 = vpack.c.b16 %v1466, %v1465
          %v1488 = vpack.c.b16 %v1468, %v1467
          %v1489 = vpack.c.b16 %v1470, %v1469
          %v1490 = vpack.c.b16 %v1472, %v1471
          %v1491 = vpack.c.b16 %v1474, %v1473
          %v1492 = vpack.c.b16 %v1476, %v1475
          %1509 = vmatpush.bf16.msra.mxu0 %v1484
          %1510 = vmatpush.bf16.msra.mxu0 %v1483
          %1511 = vmatpush.bf16.msra.mxu0 %v1482
          %1512 = vmatpush.bf16.msra.mxu0 %v1481
          %1513 = vmatpush.bf16.msra.mxu0 %v1480
          %1514 = vmatpush.bf16.msra.mxu0 %v1479
          %1515 = vmatpush.bf16.msra.mxu0 %v1478
          %1516 = vmatpush.bf16.msra.mxu0 %v1477
          %1517 = vmatmul.bf16.gmra.mxu0 %v1379
          %v1518 = vpop.f32.mrf.mxu0
          %v1519 = vadd.f32 0.0, %v1518
          %v1520 = vpop.f32.mrf.mxu0
          %1521 = vdwg.mxu0
          %1522 = vmatpush.bf16.msra.mxu0 %v1492
          %1523 = vmatpush.bf16.msra.mxu0 %v1491
          %1524 = vmatpush.bf16.msra.mxu0 %v1490
          %1525 = vmatpush.bf16.msra.mxu0 %v1489
          %1526 = vmatpush.bf16.msra.mxu0 %v1488
          %1527 = vmatpush.bf16.msra.mxu0 %v1487
          %1528 = vmatpush.bf16.msra.mxu0 %v1486
          %1529 = vmatpush.bf16.msra.mxu0 %v1485
          %1530 = vmatmul.bf16.gmra.mxu0 %v1380
          %v1531 = vpop.f32.mrf.mxu0
          %v1532 = vadd.f32 %v1519, %v1531
          %v1533 = vpop.f32.mrf.mxu0
          %1534 = vdwg.mxu0
          %v1535 = vadd.f32 %v1251, %v1532
          %v1536 = vperm.slane %v504, 2
          %v1537 = vadd.f32 %v1535, %v1536
          %1538 = vadd.xlane.f32.xlu0 %v1537
          %v1539 = vpop.xlane.xlu0 %1538
          %v1540 = vmul.f32 %v1539, %v1229
          %v1541 = vsub.f32 %v1537, %v1540
          %v1542 = vmul.f32 %v1541, %v1541
          %1543 = vadd.xlane.f32.xlu0 %v1542
          %v1544 = vpop.xlane.xlu0 %1543
          %v1545 = vmul.f32 %v1544, %v1229
          %v1546 = vadd.f32 %v1545, 1e-05
          %v1547 = vrsqrt.pop %v1546
          %v1548 = vmul.f32 %v1547, %v1546
          %v1549 = vmul.f32 %v1548, %v1547
          %v1550 = vmul.f32 0.5, %v1549
          %v1551 = vsub.f32 1.5, %v1550
          %v1552 = vmul.f32 %v1547, %v1551
          %vm1553 = vweird.f32 %v1546
          %vm1554 = vweird.f32 %v1547
          %vm1555 = vmor %vm1553, %vm1554
          %v1556 = vsel %vm1555, %v1547, %v1552
          %v1557 = vmul.f32 %v1541, %v1556
          %v1558 = vperm.slane %v504, 5
          %v1559 = vmul.f32 %v1557, %v1558
          %v1560 = vperm.slane %v504, 6
          %v1561 = vadd.f32 %v1559, %v1560
          %1562 = vst [vmem:[%s502] sm:$0xff] %v1561
          %v1563 = vpack.c.bf16 %v1561, %v1561
          %v1564 = vld [vmem:[#allocation12] sm:$0xf]
          %v1565 = vld [vmem:[#allocation12 + $0x4] sm:$0xf]
          %v1566 = vld [vmem:[#allocation12 + $0x8] sm:$0xf]
          %v1567 = vld [vmem:[#allocation12 + $0xc] sm:$0xf]
          %v1568 = vld [vmem:[#allocation12 + $0x10] sm:$0xf]
          %v1569 = vld [vmem:[#allocation12 + $0x14] sm:$0xf]
          %v1570 = vld [vmem:[#allocation12 + $0x18] sm:$0xf]
          %v1571 = vld [vmem:[#allocation12 + $0x1c] sm:$0xf]
          %v1572 = vld [vmem:[#allocation12 + $0x20] sm:$0xf]
          %v1573 = vld [vmem:[#allocation12 + $0x24] sm:$0xf]
          %v1574 = vld [vmem:[#allocation12 + $0x28] sm:$0xf]
          %v1575 = vld [vmem:[#allocation12 + $0x2c] sm:$0xf]
          %v1576 = vld [vmem:[#allocation12 + $0x30] sm:$0xf]
          %v1577 = vld [vmem:[#allocation12 + $0x34] sm:$0xf]
          %v1578 = vld [vmem:[#allocation12 + $0x38] sm:$0xf]
          %v1579 = vld [vmem:[#allocation12 + $0x3c] sm:$0xf]
          %v1596 = vunpack.c.l.b16 %v1564
          %v1597 = vunpack.c.l.b16 %v1565
          %v1598 = vunpack.c.l.b16 %v1566
          %v1599 = vunpack.c.l.b16 %v1567
          %v1600 = vunpack.c.l.b16 %v1568
          %v1601 = vunpack.c.l.b16 %v1569
          %v1602 = vunpack.c.l.b16 %v1570
          %v1603 = vunpack.c.l.b16 %v1571
          %v1604 = vunpack.c.l.b16 %v1572
          %v1605 = vunpack.c.l.b16 %v1573
          %v1606 = vunpack.c.l.b16 %v1574
          %v1607 = vunpack.c.l.b16 %v1575
          %v1608 = vunpack.c.l.b16 %v1576
          %v1609 = vunpack.c.l.b16 %v1577
          %v1610 = vunpack.c.l.b16 %v1578
          %v1611 = vunpack.c.l.b16 %v1579
          %v1612 = vpack.c.b16 %v1597, %v1596
          %v1613 = vpack.c.b16 %v1599, %v1598
          %v1614 = vpack.c.b16 %v1601, %v1600
          %v1615 = vpack.c.b16 %v1603, %v1602
          %v1616 = vpack.c.b16 %v1605, %v1604
          %v1617 = vpack.c.b16 %v1607, %v1606
          %v1618 = vpack.c.b16 %v1609, %v1608
          %v1619 = vpack.c.b16 %v1611, %v1610
          %1628 = vmatpush.bf16.msra.mxu0 %v1619
          %1629 = vmatpush.bf16.msra.mxu0 %v1618
          %1630 = vmatpush.bf16.msra.mxu0 %v1617
          %1631 = vmatpush.bf16.msra.mxu0 %v1616
          %1632 = vmatpush.bf16.msra.mxu0 %v1615
          %1633 = vmatpush.bf16.msra.mxu0 %v1614
          %1634 = vmatpush.bf16.msra.mxu0 %v1613
          %1635 = vmatpush.bf16.msra.mxu0 %v1612
          %1636 = vmatmul.bf16.gmra.mxu0 %v1563
          %v1637 = vpop.f32.mrf.mxu0
          %v1638 = vadd.f32 0.0, %v1637
          %v1639 = vpop.f32.mrf.mxu0
          %1640 = vdwg.mxu0
          %v1641 = vpack.c.bf16 %v1638, %v1638
          %v1642 = vld [vmem:[#allocation2] sm:$0xf]
          %v1643 = vld [vmem:[#allocation2 + $0x4] sm:$0xf]
          %v1644 = vld [vmem:[#allocation2 + $0x8] sm:$0xf]
          %v1645 = vld [vmem:[#allocation2 + $0xc] sm:$0xf]
          %v1646 = vld [vmem:[#allocation2 + $0x10] sm:$0xf]
          %v1647 = vld [vmem:[#allocation2 + $0x14] sm:$0xf]
          %v1648 = vld [vmem:[#allocation2 + $0x18] sm:$0xf]
          %v1649 = vld [vmem:[#allocation2 + $0x1c] sm:$0xf]
          %v1650 = vld [vmem:[#allocation2 + $0x20] sm:$0xf]
          %v1651 = vld [vmem:[#allocation2 + $0x24] sm:$0xf]
          %v1652 = vld [vmem:[#allocation2 + $0x28] sm:$0xf]
          %v1653 = vld [vmem:[#allocation2 + $0x2c] sm:$0xf]
          %v1654 = vld [vmem:[#allocation2 + $0x30] sm:$0xf]
          %v1655 = vld [vmem:[#allocation2 + $0x34] sm:$0xf]
          %v1656 = vld [vmem:[#allocation2 + $0x38] sm:$0xf]
          %v1657 = vld [vmem:[#allocation2 + $0x3c] sm:$0xf]
          %v1658 = vld [vmem:[#allocation2 + $0x40] sm:$0xf]
          %v1659 = vld [vmem:[#allocation2 + $0x44] sm:$0xf]
          %v1660 = vld [vmem:[#allocation2 + $0x48] sm:$0xf]
          %v1661 = vld [vmem:[#allocation2 + $0x4c] sm:$0xf]
          %v1662 = vld [vmem:[#allocation2 + $0x50] sm:$0xf]
          %v1663 = vld [vmem:[#allocation2 + $0x54] sm:$0xf]
          %v1664 = vld [vmem:[#allocation2 + $0x58] sm:$0xf]
          %v1665 = vld [vmem:[#allocation2 + $0x5c] sm:$0xf]
          %v1666 = vld [vmem:[#allocation2 + $0x60] sm:$0xf]
          %v1667 = vld [vmem:[#allocation2 + $0x64] sm:$0xf]
          %v1668 = vld [vmem:[#allocation2 + $0x68] sm:$0xf]
          %v1669 = vld [vmem:[#allocation2 + $0x6c] sm:$0xf]
          %v1670 = vld [vmem:[#allocation2 + $0x70] sm:$0xf]
          %v1671 = vld [vmem:[#allocation2 + $0x74] sm:$0xf]
          %v1672 = vld [vmem:[#allocation2 + $0x78] sm:$0xf]
          %v1673 = vld [vmem:[#allocation2 + $0x7c] sm:$0xf]
          %v1706 = vunpack.c.l.b16 %v1642
          %v1707 = vunpack.c.l.b16 %v1643
          %v1708 = vunpack.c.l.b16 %v1644
          %v1709 = vunpack.c.l.b16 %v1645
          %v1710 = vunpack.c.l.b16 %v1646
          %v1711 = vunpack.c.l.b16 %v1647
          %v1712 = vunpack.c.l.b16 %v1648
          %v1713 = vunpack.c.l.b16 %v1649
          %v1714 = vunpack.c.l.b16 %v1650
          %v1715 = vunpack.c.l.b16 %v1651
          %v1716 = vunpack.c.l.b16 %v1652
          %v1717 = vunpack.c.l.b16 %v1653
          %v1718 = vunpack.c.l.b16 %v1654
          %v1719 = vunpack.c.l.b16 %v1655
          %v1720 = vunpack.c.l.b16 %v1656
          %v1721 = vunpack.c.l.b16 %v1657
          %v1722 = vunpack.c.l.b16 %v1658
          %v1723 = vunpack.c.l.b16 %v1659
          %v1724 = vunpack.c.l.b16 %v1660
          %v1725 = vunpack.c.l.b16 %v1661
          %v1726 = vunpack.c.l.b16 %v1662
          %v1727 = vunpack.c.l.b16 %v1663
          %v1728 = vunpack.c.l.b16 %v1664
          %v1729 = vunpack.c.l.b16 %v1665
          %v1730 = vunpack.c.l.b16 %v1666
          %v1731 = vunpack.c.l.b16 %v1667
          %v1732 = vunpack.c.l.b16 %v1668
          %v1733 = vunpack.c.l.b16 %v1669
          %v1734 = vunpack.c.l.b16 %v1670
          %v1735 = vunpack.c.l.b16 %v1671
          %v1736 = vunpack.c.l.b16 %v1672
          %v1737 = vunpack.c.l.b16 %v1673
          %v1738 = vpack.c.b16 %v1707, %v1706
          %v1739 = vpack.c.b16 %v1709, %v1708
          %v1740 = vpack.c.b16 %v1711, %v1710
          %v1741 = vpack.c.b16 %v1713, %v1712
          %v1742 = vpack.c.b16 %v1715, %v1714
          %v1743 = vpack.c.b16 %v1717, %v1716
          %v1744 = vpack.c.b16 %v1719, %v1718
          %v1745 = vpack.c.b16 %v1721, %v1720
          %v1746 = vpack.c.b16 %v1723, %v1722
          %v1747 = vpack.c.b16 %v1725, %v1724
          %v1748 = vpack.c.b16 %v1727, %v1726
          %v1749 = vpack.c.b16 %v1729, %v1728
          %v1750 = vpack.c.b16 %v1731, %v1730
          %v1751 = vpack.c.b16 %v1733, %v1732
          %v1752 = vpack.c.b16 %v1735, %v1734
          %v1753 = vpack.c.b16 %v1737, %v1736
          %1770 = vmatpush.bf16.xpose.msra.mxu0 %v1745
          %1771 = vmatpush.bf16.xpose.msra.mxu0 %v1744
          %1772 = vmatpush.bf16.xpose.msra.mxu0 %v1743
          %1773 = vmatpush.bf16.xpose.msra.mxu0 %v1742
          %1774 = vmatpush.bf16.xpose.msra.mxu0 %v1741
          %1775 = vmatpush.bf16.xpose.msra.mxu0 %v1740
          %1776 = vmatpush.bf16.xpose.msra.mxu0 %v1739
          %1777 = vmatpush.bf16.xpose.msra.mxu0 %v1738
          %1778 = vmatmul.bf16.gmra.mxu0 %v1641
          %v1779 = vpop.f32.mrf.mxu0
          %v1780 = vadd.f32 0.0, %v1779
          %v1781 = vpop.f32.mrf.mxu0
          %1782 = vdwg.mxu0
          %1783 = vmatpush.bf16.xpose.msra.mxu0 %v1753
          %1784 = vmatpush.bf16.xpose.msra.mxu0 %v1752
          %1785 = vmatpush.bf16.xpose.msra.mxu0 %v1751
          %1786 = vmatpush.bf16.xpose.msra.mxu0 %v1750
          %1787 = vmatpush.bf16.xpose.msra.mxu0 %v1749
          %1788 = vmatpush.bf16.xpose.msra.mxu0 %v1748
          %1789 = vmatpush.bf16.xpose.msra.mxu0 %v1747
          %1790 = vmatpush.bf16.xpose.msra.mxu0 %v1746
          %1791 = vmatmul.bf16.gmra.mxu0 %v1641
          %v1792 = vpop.f32.mrf.mxu0
          %v1793 = vadd.f32 0.0, %v1792
          %v1794 = vpop.f32.mrf.mxu0
          %1795 = vdwg.mxu0
          %v1796 = vpack.c.bf16 %v1793, %v1780
          %1797 = vst [vmem:[%s488] sm:$0xff] %v1796
        $region88: #{_m2t2_forward.1} parent=59 // pred_fallthru
          _
        %p1798 = scmp.lt.s32.totalorder %s33, 1
        %s1799 = scalar_select %p1798, %s33, 1
        %s1800 = smul.addr %s1799, 8
        %s1801 = scalar_lea.vmem %s10, %s1800
        %s1802 = sand.u32 %s292, 1
        %s1803 = scalar_lea.sflag [#allocation8], %s1802
        %s1804 = sand.u32 %s292, 1
        %s1805 = smul.addr %s1804, 8
        %s1806 = scalar_lea.vmem [#allocation15], %s1805
        // Predicated region
        $region89: #{_m2t2_forward.1} parent=59 // pred_check
          %p1807 = pneg %p276
        $region90: #{_m2t2_forward.1} parent=59 // pred_check_branch
          %1809 = sbr.rel (%p1807) target = $region92
        $region91: #{_m2t2_forward.1} parent=59 // pred_region
          _
        $region92: #{_m2t2_forward.1} parent=59 // pred_fallthru
          _
        // Predicated region
        $region93: #{_m2t2_forward.1} parent=59 // pred_check
          %p1810 = pneg %p302
        $region94: #{_m2t2_forward.1} parent=59 // pred_check_branch
          %1812 = sbr.rel (%p1810) target = $region96
        $region95: #{_m2t2_forward.1} parent=59 // pred_region
          %1814 = vsyncadd %s1803, 0
          %s1815 = smul.addr %s33, 2
          %s1816 = smul.addr %s1815, 4
          %s1817 = scalar_lea.hbm %s11, %s1816
          %s1819 = sshll.u32 %s1806, 4
          %s1820 = int_to_ptr.vmem [resolvable:$true] %s1819
          %s1821 = sshll.u32 %s1817, 4
          %s1822 = int_to_ptr.hbm [resolvable:$true] %s1821
          %1824 = dma.vmem_to_hbm [thread:$0]  %s1820, 128, %s1822, %s1803
        $region96: #{_m2t2_forward.1} parent=59 // pred_fallthru
          _
      $region60: #{_m2t2_forward.1} parent=5 // pred_fallthru
        _
      %p1825 = scmp.le.s32.totalorder 2, %s24
      // Predicated region
      $region97: #{_m2t2_forward.1} parent=5 // pred_check
        %p1826 = pneg %p1825
      $region98: #{_m2t2_forward.1} parent=5 // pred_check_branch
        %1828 = sbr.rel (%p1826) target = $region100
      $region99: #{_m2t2_forward.1} parent=5 // pred_region
        %s1829 = ssub.s32 %s24, 2
        // Predicated region
        $region101: #{_m2t2_forward.1} parent=99 // pred_check
          %p1830 = pneg %p282
        $region102: #{_m2t2_forward.1} parent=99 // pred_check_branch
          %1832 = sbr.rel (%p1830) target = $region104
        $region103: #{_m2t2_forward.1} parent=99 // pred_region
          %p1833 = scmp.lt.s32.totalorder %s35, 1
          %s1834 = scalar_select %p1833, %s35, 1
          %s1835 = smul.addr %s1834, 8
          %s1836 = scalar_lea.vmem %s10, %s1835
        $region104: #{_m2t2_forward.1} parent=99 // pred_fallthru
          _
        // Predicated region
        $region105: #{_m2t2_forward.1} parent=99 // pred_check
          %p1837 = pneg %p308
        $region106: #{_m2t2_forward.1} parent=99 // pred_check_branch
          %1839 = sbr.rel (%p1837) target = $region108
        $region107: #{_m2t2_forward.1} parent=99 // pred_region
          %s1840 = sand.u32 %s293, 1
          %s1841 = scalar_lea.sflag [#allocation8], %s1840
          %s1842 = sand.u32 %s293, 1
          %s1843 = smul.addr %s1842, 8
          %s1844 = scalar_lea.vmem [#allocation15], %s1843
          %1846 = dma.done %s1841, 128
        $region108: #{_m2t2_forward.1} parent=99 // pred_fallthru
          _
      $region100: #{_m2t2_forward.1} parent=5 // pred_fallthru
        _
    $region6: #{_m2t2_forward.1} parent=1 // loop_footer
      %s28 = sadd.s32 1, %s24
    $region7: #{_m2t2_forward.1} parent=1 // loop_footer_branch
      %23 = sbr.rel target = $region3
    $region8: #{_m2t2_forward.1} parent=1 // loop_exit
      _
    %1847 = vsyncpa [#allocation7], 1
    %s1848 = scalar_lea.sflag [#allocation7], 1
    %1849 = vsyncpa %s1848, 1
    %1850 = vsyncpa [#allocation10], 1
    %1851 = vsyncpa [#allocation13], 1
    %1852 = vsyncpa [#allocation8], 1
    %s1853 = scalar_lea.sflag [#allocation8], 1
    %1854 = vsyncpa %s1853, 1

</llo_original>
